<compile_context>
chip_gen: v6e
topology: v6e:2x2x1
jax: 0.10.0
libtpu: 0.0.40
codegen_flags: <defaults>
</compile_context>

<pallas_src>
import functools

import jax
import jax.numpy as jnp
from jax import lax
from jax.experimental import pallas as pl
from jax.experimental.pallas import tpu as pltpu


def bilstm_kernel(T, T_pad, Tc,
                  x_f_ref,      # (Tc, TB, E)  fwd-direction time chunk
                  x_b_ref,      # (Tc, TB, E)  bwd-direction chunk (reversed chunk order)
                  w_ih_f_ref,   # (E, 4H)      gate cols in [i, f, o, g] order
                  w_ih_b_ref,   # (E, 4H)
                  b_ih_f_ref,   # (1, 4H) f32  folded (b_ih + b_hh)
                  b_ih_b_ref,   # (1, 4H) f32
                  w_hh_ref,     # (2H, 8H)     block-diag [fwd | bwd] hidden->gates
                  w_fc_f_ref,   # (H, O)       fc rows for h_fwd
                  w_fc_b_ref,   # (H, O)       fc rows for h_bwd
                  b_fc_ref,     # (1, O) f32
                  out_ref,      # (TB, O) f32
                  gates_f_ref,  # scratch (Tc, TB, 4H) f32
                  gates_b_ref,  # scratch (Tc, TB, 4H) f32
                  hf_ref, cf_ref, hb_ref, cb_ref):  # scratch (TB, H) f32 carries
    _, TB, E = x_f_ref.shape
    H4 = gates_f_ref.shape[-1]
    H = H4 // 4
    c_idx = pl.program_id(1)
    nc = pl.num_programs(1)

    # ---- init carries at the first time chunk of each batch tile -----------------
    @pl.when(c_idx == 0)
    def _():
        hf_ref[...] = jnp.zeros_like(hf_ref)
        cf_ref[...] = jnp.zeros_like(cf_ref)
        hb_ref[...] = jnp.zeros_like(hb_ref)
        cb_ref[...] = jnp.zeros_like(cb_ref)

    # ---- per-chunk input projection (hoisted out of the recurrence) --------------
    # Two GEMMs write straight into the gate scratches: no (Tc*TB, 8H) temporary.
    xf2 = x_f_ref[...].reshape(Tc * TB, E)
    xb2 = x_b_ref[...].reshape(Tc * TB, E)
    gf = jnp.dot(xf2, w_ih_f_ref[...], preferred_element_type=jnp.float32) + b_ih_f_ref[...]
    gb = jnp.dot(xb2, w_ih_b_ref[...], preferred_element_type=jnp.float32) + b_ih_b_ref[...]
    gates_f_ref[...] = gf.reshape(Tc, TB, H4)
    gates_b_ref[...] = gb.reshape(Tc, TB, H4)

    w_hh = w_hh_ref[...]               # small, hoisted into vregs once
    mxu_dtype = w_hh.dtype

    def cell(g, c):
        # gate order [i, f, o, g]: one 3H-wide sigmoid + one H-wide tanh.
        sig = jax.nn.sigmoid(g[:, :3 * H])
        i = sig[:, :H]
        f = sig[:, H:2 * H]
        o = sig[:, 2 * H:3 * H]
        gg = jnp.tanh(g[:, 3 * H:])
        c_new = f * c + i * gg
        h_new = o * jnp.tanh(c_new)
        return h_new, c_new

    def step(t, carry):
        h_f, c_f, h_b, c_b = carry
        # One block-diagonal MXU op covers both directions' hidden matmuls.
        h_cat = jnp.concatenate([h_f, h_b], axis=1).astype(mxu_dtype)     # (TB, 2H)
        g_hh = jnp.dot(h_cat, w_hh, preferred_element_type=jnp.float32)   # (TB, 8H)
        g_f = gates_f_ref[t] + g_hh[:, :H4]
        g_b = gates_b_ref[Tc - 1 - t] + g_hh[:, H4:]
        h_f_n, c_f_n = cell(g_f, c_f)
        h_b_n, c_b_n = cell(g_b, c_b)
        if T_pad != T:
            # Only traced when time padding exists: pad steps must not touch state.
            s = c_idx * Tc + t
            vf = s < T                     # fwd padding sits at the end of time
            vb = s >= (T_pad - T)          # bwd direction consumes the padding first
            h_f_n = jnp.where(vf, h_f_n, h_f)
            c_f_n = jnp.where(vf, c_f_n, c_f)
            h_b_n = jnp.where(vb, h_b_n, h_b)
            c_b_n = jnp.where(vb, c_b_n, c_b)
        return h_f_n, c_f_n, h_b_n, c_b_n

    init = (hf_ref[...], cf_ref[...], hb_ref[...], cb_ref[...])
    h_f, c_f, h_b, c_b = lax.fori_loop(0, Tc, step, init,
                                       unroll=True if Tc <= 16 else 8)
    hf_ref[...] = h_f
    cf_ref[...] = c_f
    hb_ref[...] = h_b
    cb_ref[...] = c_b

    # ---- final FC on the last chunk: split-weight dots, no lane concat -----------
    @pl.when(c_idx == nc - 1)
    def _():
        out = (jnp.dot(h_f.astype(mxu_dtype), w_fc_f_ref[...],
                       preferred_element_type=jnp.float32)
               + jnp.dot(h_b.astype(mxu_dtype), w_fc_b_ref[...],
                         preferred_element_type=jnp.float32)
               + b_fc_ref[...])
        out_ref[...] = out.astype(out_ref.dtype)


def _round_up(a, m):
    return (a + m - 1) // m * m


def bilstm_model_forward(token_ids, params, compute_dtype=jnp.bfloat16, t_chunk=32):
    """Equivalent of BiLSTM_Model.forward with attention=None. Returns (out, None).

    compute_dtype: dtype fed to the MXU (bf16 default; gate math / cell state stay
    f32 via preferred_element_type).
    """
    emb = jnp.take(params["embedding_matrix"], token_ids, axis=0)     # (B, T, E) glue gather
    B, T, E = emb.shape
    H = params["w_hh_f"].shape[1]        # static shape, never a traced value
    O = params["fc_w"].shape[0]
    H4 = 4 * H

    # --- tiling: batch padded to a sublane multiple, time padded to a chunk -------
    # TODO(synk): on v7x prefer >=2 batch tiles (cap TB) when B is large enough so
    # the "parallel" batch axis actually shards across both TensorCores.
    TB = 128 if B > 128 else _round_up(B, 8)
    B_pad = _round_up(B, TB)
    Tc = T if T <= t_chunk else t_chunk
    T_pad = _round_up(T, Tc)
    nc = T_pad // Tc

    # Time-major layout; pad time (end) and batch with zeros. Padded time steps are
    # masked inside the kernel so they never update the recurrent state.
    x = jnp.transpose(emb, (1, 0, 2)).astype(compute_dtype)           # (T, B, E)
    x = jnp.pad(x, ((0, T_pad - T), (0, B_pad - B), (0, 0)))

    # --- weight prep (glue): reorder gates to [i, f, o, g], transpose, fold biases
    def reorder(w):   # rows blocked [i, f, g, o] (PyTorch) -> [i, f, o, g]
        return jnp.concatenate([w[0:H], w[H:2 * H], w[3 * H:4 * H], w[2 * H:3 * H]], axis=0)

    w_ih_f = reorder(params["w_ih_f"]).T.astype(compute_dtype)         # (E, 4H)
    w_ih_b = reorder(params["w_ih_b"]).T.astype(compute_dtype)         # (E, 4H)
    b_ih_f = reorder(params["b_ih_f"] + params["b_hh_f"]).reshape(1, H4).astype(jnp.float32)
    b_ih_b = reorder(params["b_ih_b"] + params["b_hh_b"]).reshape(1, H4).astype(jnp.float32)
    whh_f = reorder(params["w_hh_f"]).T                                # (H, 4H)
    whh_b = reorder(params["w_hh_b"]).T                                # (H, 4H)
    zero = jnp.zeros((H, H4), whh_f.dtype)
    w_hh = jnp.concatenate(
        [jnp.concatenate([whh_f, zero], axis=1),
         jnp.concatenate([zero, whh_b], axis=1)], axis=0).astype(compute_dtype)  # (2H, 8H)
    w_fc_t = params["fc_w"].T                                          # (2H, O)
    w_fc_f = w_fc_t[:H].astype(compute_dtype)                          # (H, O)
    w_fc_b = w_fc_t[H:].astype(compute_dtype)                          # (H, O)
    b_fc = params["fc_b"].reshape(1, O).astype(jnp.float32)            # (1, O)

    def full_spec(shape):
        return pl.BlockSpec(shape, lambda b, c: tuple(0 for _ in shape))

    kernel = functools.partial(bilstm_kernel, T, T_pad, Tc)
    grid = (B_pad // TB, nc)
    out = pl.pallas_call(
        kernel,
        out_shape=jax.ShapeDtypeStruct((B_pad, O), jnp.float32),
        grid_spec=pltpu.PrefetchScalarGridSpec(
            num_scalar_prefetch=0,
            grid=grid,
            in_specs=[
                pl.BlockSpec((Tc, TB, E), lambda b, c: (c, b, 0)),           # fwd chunk
                pl.BlockSpec((Tc, TB, E), lambda b, c: (nc - 1 - c, b, 0)),  # bwd chunk
                full_spec((E, H4)),
                full_spec((E, H4)),
                full_spec((1, H4)),
                full_spec((1, H4)),
                full_spec((2 * H, 2 * H4)),
                full_spec((H, O)),
                full_spec((H, O)),
                full_spec((1, O)),
            ],
            out_specs=pl.BlockSpec((TB, O), lambda b, c: (b, 0)),
            scratch_shapes=[
                pltpu.VMEM((Tc, TB, H4), jnp.float32),   # fwd gate slab (one chunk only)
                pltpu.VMEM((Tc, TB, H4), jnp.float32),   # bwd gate slab (one chunk only)
                pltpu.VMEM((TB, H), jnp.float32),        # h_fwd carry
                pltpu.VMEM((TB, H), jnp.float32),        # c_fwd carry
                pltpu.VMEM((TB, H), jnp.float32),        # h_bwd carry
                pltpu.VMEM((TB, H), jnp.float32),        # c_bwd carry
            ],
        ),
        compiler_params=pltpu.CompilerParams(
            dimension_semantics=("parallel", "arbitrary"),
            vmem_limit_bytes=32 * 1024 * 1024,
        ),
    )(x, x, w_ih_f, w_ih_b, b_ih_f, b_ih_b, w_hh, w_fc_f, w_fc_b, b_fc)

    # TODO(synk): attention branch of the module is not implemented (module is used
    # with attention=None here), so attn_weights is always None.
    return out[:B], None


def reference_forward(token_ids, params):
    """Pure-JAX reference mirroring the PyTorch forward (attention=None)."""
    emb = jnp.take(params["embedding_matrix"], token_ids, axis=0)
    B, T, E = emb.shape
    H = params["w_hh_f"].shape[1]

    def run_dir(w_ih, w_hh, b_ih, b_hh, reverse):
        h = jnp.zeros((B, H), jnp.float32)
        c = jnp.zeros((B, H), jnp.float32)
        order = range(T - 1, -1, -1) if reverse else range(T)
        for t in order:
            gates = emb[:, t, :] @ w_ih.T + h @ w_hh.T + b_ih + b_hh
            i = jax.nn.sigmoid(gates[:, 0 * H:1 * H])
            f = jax.nn.sigmoid(gates[:, 1 * H:2 * H])
            g = jnp.tanh(gates[:, 2 * H:3 * H])
            o = jax.nn.sigmoid(gates[:, 3 * H:4 * H])
            c = f * c + i * g
            h = o * jnp.tanh(c)
        return h

    h_f = run_dir(params["w_ih_f"], params["w_hh_f"], params["b_ih_f"], params["b_hh_f"], False)
    h_b = run_dir(params["w_ih_b"], params["w_hh_b"], params["b_ih_b"], params["b_hh_b"], True)
    final_hidden = jnp.concatenate([h_f, h_b], axis=1)
    return final_hidden @ params["fc_w"].T + params["fc_b"]


def init_params(key, vocab_size, embed_dim, hidden_dim, output_dim):
    ks = jax.random.split(key, 12)
    H4 = 4 * hidden_dim
    s = 0.1
    return {
        "embedding_matrix": jax.random.normal(ks[0], (vocab_size, embed_dim), jnp.float32),
        "w_ih_f": s * jax.random.normal(ks[1], (H4, embed_dim), jnp.float32),
        "w_hh_f": s * jax.random.normal(ks[2], (H4, hidden_dim), jnp.float32),
        "b_ih_f": s * jax.random.normal(ks[3], (H4,), jnp.float32),
        "b_hh_f": s * jax.random.normal(ks[4], (H4,), jnp.float32),
        "w_ih_b": s * jax.random.normal(ks[5], (H4, embed_dim), jnp.float32),
        "w_hh_b": s * jax.random.normal(ks[6], (H4, hidden_dim), jnp.float32),
        "b_ih_b": s * jax.random.normal(ks[7], (H4,), jnp.float32),
        "b_hh_b": s * jax.random.normal(ks[8], (H4,), jnp.float32),
        "fc_w": s * jax.random.normal(ks[9], (output_dim, 2 * hidden_dim), jnp.float32),
        "fc_b": s * jax.random.normal(ks[10], (output_dim,), jnp.float32),
    }


if __name__ == "__main__":
    # Small shapes consistent with the module: batch=2, seq=8, embed=16, hidden=32, out=4.
    vocab_size, embed_dim, hidden_dim, output_dim = 50, 16, 32, 4
    B, T = 2, 8

    key = jax.random.PRNGKey(0)
    pkey, xkey = jax.random.split(key)
    params = init_params(pkey, vocab_size, embed_dim, hidden_dim, output_dim)
    token_ids = jax.random.randint(xkey, (B, T), 0, vocab_size, dtype=jnp.int32)

    ref = jax.block_until_ready(reference_forward(token_ids, params))

    # f32 MXU path: tight numerical check against the pure-JAX reference.
    fwd_f32 = jax.jit(functools.partial(bilstm_model_forward, compute_dtype=jnp.float32))
    out_f32, attn = fwd_f32(token_ids, params)
    out_f32 = jax.block_until_ready(out_f32)
    assert attn is None
    assert out_f32.shape == (B, output_dim)
    assert jnp.allclose(out_f32, ref, atol=5e-4, rtol=5e-4), (out_f32, ref)

    # bf16 MXU path (default / production throughput): relaxed tolerance.
    fwd_bf16 = jax.jit(bilstm_model_forward)
    out_bf16, _ = fwd_bf16(token_ids, params)
    out_bf16 = jax.block_until_ready(out_bf16)
    assert out_bf16.shape == (B, output_dim)
    assert jnp.allclose(out_bf16, ref, atol=3e-2, rtol=3e-2), (out_bf16, ref)

    print("KERNEL_OK")
</pallas_src>

<mosaic_0001>
module attributes {stable_mosaic.version = 11 : i64} {
  func.func @bilstm_kernel(%arg0: i32, %arg1: i32, %arg2: memref<8x8x16xf32, #tpu.memory_space<vmem>>, %arg3: memref<8x8x16xf32, #tpu.memory_space<vmem>>, %arg4: memref<16x128xf32, #tpu.memory_space<vmem>>, %arg5: memref<16x128xf32, #tpu.memory_space<vmem>>, %arg6: memref<1x128xf32, #tpu.memory_space<vmem>>, %arg7: memref<1x128xf32, #tpu.memory_space<vmem>>, %arg8: memref<64x256xf32, #tpu.memory_space<vmem>>, %arg9: memref<32x4xf32, #tpu.memory_space<vmem>>, %arg10: memref<32x4xf32, #tpu.memory_space<vmem>>, %arg11: memref<1x4xf32, #tpu.memory_space<vmem>>, %arg12: memref<8x4xf32, #tpu.memory_space<vmem>>, %arg13: memref<8x8x128xf32, #tpu.memory_space<vmem>>, %arg14: memref<8x8x128xf32, #tpu.memory_space<vmem>>, %arg15: memref<8x32xf32, #tpu.memory_space<vmem>>, %arg16: memref<8x32xf32, #tpu.memory_space<vmem>>, %arg17: memref<8x32xf32, #tpu.memory_space<vmem>>, %arg18: memref<8x32xf32, #tpu.memory_space<vmem>>) attributes {dimension_semantics = [#tpu.dimension_semantics<parallel>, #tpu.dimension_semantics<arbitrary>], iteration_bounds = array<i64: 1, 1>, scalar_prefetch = 0 : i64, scratch_operands = 6 : i64, tpu.core_type = #tpu.core_type<tc>, window_params = [{transform_indices = @transform_0, window_bounds = array<i64: 8, 8, 16>}, {transform_indices = @transform_1, window_bounds = array<i64: 8, 8, 16>}, {pipeline_mode = #tpu.pipeline_mode<synchronous>, transform_indices = @transform_2, window_bounds = array<i64: 16, 128>}, {pipeline_mode = #tpu.pipeline_mode<synchronous>, transform_indices = @transform_3, window_bounds = array<i64: 16, 128>}, {pipeline_mode = #tpu.pipeline_mode<synchronous>, transform_indices = @transform_4, window_bounds = array<i64: 1, 128>}, {pipeline_mode = #tpu.pipeline_mode<synchronous>, transform_indices = @transform_5, window_bounds = array<i64: 1, 128>}, {pipeline_mode = #tpu.pipeline_mode<synchronous>, transform_indices = @transform_6, window_bounds = array<i64: 64, 256>}, {pipeline_mode = #tpu.pipeline_mode<synchronous>, transform_indices = @transform_7, window_bounds = array<i64: 32, 4>}, {pipeline_mode = #tpu.pipeline_mode<synchronous>, transform_indices = @transform_8, window_bounds = array<i64: 32, 4>}, {pipeline_mode = #tpu.pipeline_mode<synchronous>, transform_indices = @transform_9, window_bounds = array<i64: 1, 4>}, {transform_indices = @transform_10, window_bounds = array<i64: 8, 4>}]} {
    %c0_i32 = arith.constant 0 : i32
    %0 = arith.cmpi eq, %arg1, %c0_i32 : i32
    %1 = arith.extui %0 : i1 to i32
    %c0_i32_0 = arith.constant 0 : i32
    %2 = arith.cmpi ne, %1, %c0_i32_0 : i32
    scf.if %2 {
      %cst_106 = arith.constant 0.000000e+00 : f32
      %393 = vector.broadcast %cst_106 : f32 to vector<8x32xf32>
      %c0_107 = arith.constant 0 : index
      %c0_108 = arith.constant 0 : index
      %394 = vector.load %arg15[%c0_107, %c0_108] : memref<8x32xf32, #tpu.memory_space<vmem>>, vector<8x32xf32>
      tpu.vector_store %arg15[%c0_107, %c0_108], %393 {strides = array<i32>} : memref<8x32xf32, #tpu.memory_space<vmem>>, vector<8x32xf32>,
      %cst_109 = arith.constant 0.000000e+00 : f32
      %395 = vector.broadcast %cst_109 : f32 to vector<8x32xf32>
      %c0_110 = arith.constant 0 : index
      %c0_111 = arith.constant 0 : index
      %396 = vector.load %arg16[%c0_110, %c0_111] : memref<8x32xf32, #tpu.memory_space<vmem>>, vector<8x32xf32>
      tpu.vector_store %arg16[%c0_110, %c0_111], %395 {strides = array<i32>} : memref<8x32xf32, #tpu.memory_space<vmem>>, vector<8x32xf32>,
      %cst_112 = arith.constant 0.000000e+00 : f32
      %397 = vector.broadcast %cst_112 : f32 to vector<8x32xf32>
      %c0_113 = arith.constant 0 : index
      %c0_114 = arith.constant 0 : index
      %398 = vector.load %arg17[%c0_113, %c0_114] : memref<8x32xf32, #tpu.memory_space<vmem>>, vector<8x32xf32>
      tpu.vector_store %arg17[%c0_113, %c0_114], %397 {strides = array<i32>} : memref<8x32xf32, #tpu.memory_space<vmem>>, vector<8x32xf32>,
      %cst_115 = arith.constant 0.000000e+00 : f32
      %399 = vector.broadcast %cst_115 : f32 to vector<8x32xf32>
      %c0_116 = arith.constant 0 : index
      %c0_117 = arith.constant 0 : index
      %400 = vector.load %arg18[%c0_116, %c0_117] : memref<8x32xf32, #tpu.memory_space<vmem>>, vector<8x32xf32>
      tpu.vector_store %arg18[%c0_116, %c0_117], %399 {strides = array<i32>} : memref<8x32xf32, #tpu.memory_space<vmem>>, vector<8x32xf32>,
    } else {
    }
    %c0 = arith.constant 0 : index
    %c0_1 = arith.constant 0 : index
    %c0_2 = arith.constant 0 : index
    %3 = vector.load %arg2[%c0, %c0_1, %c0_2] : memref<8x8x16xf32, #tpu.memory_space<vmem>>, vector<8x8x16xf32>
    %4 = vector.shape_cast %3 : vector<8x8x16xf32> to vector<64x16xf32>
    %c0_3 = arith.constant 0 : index
    %c0_4 = arith.constant 0 : index
    %c0_5 = arith.constant 0 : index
    %5 = vector.load %arg3[%c0_3, %c0_4, %c0_5] : memref<8x8x16xf32, #tpu.memory_space<vmem>>, vector<8x8x16xf32>
    %6 = vector.shape_cast %5 : vector<8x8x16xf32> to vector<64x16xf32>
    %c0_6 = arith.constant 0 : index
    %c0_7 = arith.constant 0 : index
    %7 = vector.load %arg4[%c0_6, %c0_7] : memref<16x128xf32, #tpu.memory_space<vmem>>, vector<16x128xf32>
    %cst = arith.constant dense<0.000000e+00> : vector<64x128xf32>
    %8 = tpu.matmul %4, %7, %cst {dimension_numbers = #tpu.dot_dimension_numbers<[1], [0], [0], [1], [0, 0, 1, 1], [], []>} : vector<64x16xf32>, vector<16x128xf32>, vector<64x128xf32> -> vector<64x128xf32>
    %c0_8 = arith.constant 0 : index
    %c0_9 = arith.constant 0 : index
    %9 = vector.load %arg6[%c0_8, %c0_9] : memref<1x128xf32, #tpu.memory_space<vmem>>, vector<1x128xf32>
    %10 = vector.broadcast %9 : vector<1x128xf32> to vector<64x128xf32>
    %11 = arith.addf %8, %10 : vector<64x128xf32>
    %c0_10 = arith.constant 0 : index
    %c0_11 = arith.constant 0 : index
    %12 = vector.load %arg5[%c0_10, %c0_11] : memref<16x128xf32, #tpu.memory_space<vmem>>, vector<16x128xf32>
    %cst_12 = arith.constant dense<0.000000e+00> : vector<64x128xf32>
    %13 = tpu.matmul %6, %12, %cst_12 {dimension_numbers = #tpu.dot_dimension_numbers<[1], [0], [0], [1], [0, 0, 1, 1], [], []>} : vector<64x16xf32>, vector<16x128xf32>, vector<64x128xf32> -> vector<64x128xf32>
    %c0_13 = arith.constant 0 : index
    %c0_14 = arith.constant 0 : index
    %14 = vector.load %arg7[%c0_13, %c0_14] : memref<1x128xf32, #tpu.memory_space<vmem>>, vector<1x128xf32>
    %15 = vector.broadcast %14 : vector<1x128xf32> to vector<64x128xf32>
    %16 = arith.addf %13, %15 : vector<64x128xf32>
    %17 = vector.shape_cast %11 : vector<64x128xf32> to vector<8x8x128xf32>
    %c0_15 = arith.constant 0 : index
    %c0_16 = arith.constant 0 : index
    %c0_17 = arith.constant 0 : index
    %18 = vector.load %arg13[%c0_15, %c0_16, %c0_17] : memref<8x8x128xf32, #tpu.memory_space<vmem>>, vector<8x8x128xf32>
    tpu.vector_store %arg13[%c0_15, %c0_16, %c0_17], %17 {strides = array<i32>} : memref<8x8x128xf32, #tpu.memory_space<vmem>>, vector<8x8x128xf32>,
    %19 = vector.shape_cast %16 : vector<64x128xf32> to vector<8x8x128xf32>
    %c0_18 = arith.constant 0 : index
    %c0_19 = arith.constant 0 : index
    %c0_20 = arith.constant 0 : index
    %20 = vector.load %arg14[%c0_18, %c0_19, %c0_20] : memref<8x8x128xf32, #tpu.memory_space<vmem>>, vector<8x8x128xf32>
    tpu.vector_store %arg14[%c0_18, %c0_19, %c0_20], %19 {strides = array<i32>} : memref<8x8x128xf32, #tpu.memory_space<vmem>>, vector<8x8x128xf32>,
    %c0_21 = arith.constant 0 : index
    %c0_22 = arith.constant 0 : index
    %21 = vector.load %arg8[%c0_21, %c0_22] : memref<64x256xf32, #tpu.memory_space<vmem>>, vector<64x256xf32>
    %c0_23 = arith.constant 0 : index
    %c0_24 = arith.constant 0 : index
    %22 = vector.load %arg15[%c0_23, %c0_24] : memref<8x32xf32, #tpu.memory_space<vmem>>, vector<8x32xf32>
    %c0_25 = arith.constant 0 : index
    %c0_26 = arith.constant 0 : index
    %23 = vector.load %arg16[%c0_25, %c0_26] : memref<8x32xf32, #tpu.memory_space<vmem>>, vector<8x32xf32>
    %c0_27 = arith.constant 0 : index
    %c0_28 = arith.constant 0 : index
    %24 = vector.load %arg17[%c0_27, %c0_28] : memref<8x32xf32, #tpu.memory_space<vmem>>, vector<8x32xf32>
    %c0_29 = arith.constant 0 : index
    %c0_30 = arith.constant 0 : index
    %25 = vector.load %arg18[%c0_29, %c0_30] : memref<8x32xf32, #tpu.memory_space<vmem>>, vector<8x32xf32>
    %c0_i32_31 = arith.constant 0 : i32
    %26 = tpu.concatenate %22, %24 in 1 : vector<8x32xf32>, vector<8x32xf32> -> vector<8x64xf32>
    %cst_32 = arith.constant dense<0.000000e+00> : vector<8x256xf32>
    %27 = tpu.matmul %26, %21, %cst_32 {dimension_numbers = #tpu.dot_dimension_numbers<[1], [0], [0], [1], [0, 0, 1, 1], [], []>} : vector<8x64xf32>, vector<64x256xf32>, vector<8x256xf32> -> vector<8x256xf32>
    %28 = arith.index_cast %c0_i32_31 : i32 to index
    %c0_33 = arith.constant 0 : index
    %c0_34 = arith.constant 0 : index
    %29 = vector.load %arg13[%28, %c0_33, %c0_34] : memref<8x8x128xf32, #tpu.memory_space<vmem>>, vector<1x8x128xf32>
    %30 = vector.shape_cast %29 : vector<1x8x128xf32> to vector<8x128xf32>
    %31 = vector.extract_strided_slice %27 {offsets = [0, 0], sizes = [8, 128], strides = [1, 1]} : vector<8x256xf32> to vector<8x128xf32>
    %32 = arith.addf %30, %31 : vector<8x128xf32>
    %c7_i32 = arith.constant 7 : i32
    %33 = arith.subi %c7_i32, %c0_i32_31 : i32
    %34 = arith.index_cast %33 : i32 to index
    %c0_35 = arith.constant 0 : index
    %c0_36 = arith.constant 0 : index
    %35 = vector.load %arg14[%34, %c0_35, %c0_36] : memref<8x8x128xf32, #tpu.memory_space<vmem>>, vector<1x8x128xf32>
    %36 = vector.shape_cast %35 : vector<1x8x128xf32> to vector<8x128xf32>
    %37 = vector.extract_strided_slice %27 {offsets = [0, 128], sizes = [8, 128], strides = [1, 1]} : vector<8x256xf32> to vector<8x128xf32>
    %38 = arith.addf %36, %37 : vector<8x128xf32>
    %39 = vector.extract_strided_slice %32 {offsets = [0, 0], sizes = [8, 96], strides = [1, 1]} : vector<8x128xf32> to vector<8x96xf32>
    %40 = arith.negf %39 : vector<8x96xf32>
    %41 = math.exp %40 : vector<8x96xf32>
    %cst_37 = arith.constant 1.000000e+00 : f32
    %42 = vector.broadcast %cst_37 : f32 to vector<8x96xf32>
    %43 = arith.addf %42, %41 : vector<8x96xf32>
    %44 = arith.divf %42, %43 : vector<8x96xf32>
    %45 = vector.extract_strided_slice %44 {offsets = [0, 0], sizes = [8, 32], strides = [1, 1]} : vector<8x96xf32> to vector<8x32xf32>
    %46 = vector.extract_strided_slice %44 {offsets = [0, 32], sizes = [8, 32], strides = [1, 1]} : vector<8x96xf32> to vector<8x32xf32>
    %47 = vector.extract_strided_slice %44 {offsets = [0, 64], sizes = [8, 32], strides = [1, 1]} : vector<8x96xf32> to vector<8x32xf32>
    %48 = vector.extract_strided_slice %32 {offsets = [0, 96], sizes = [8, 32], strides = [1, 1]} : vector<8x128xf32> to vector<8x32xf32>
    %49 = math.tanh %48 : vector<8x32xf32>
    %50 = arith.mulf %46, %23 : vector<8x32xf32>
    %51 = arith.mulf %45, %49 : vector<8x32xf32>
    %52 = arith.addf %50, %51 : vector<8x32xf32>
    %53 = math.tanh %52 : vector<8x32xf32>
    %54 = arith.mulf %47, %53 : vector<8x32xf32>
    %55 = vector.extract_strided_slice %38 {offsets = [0, 0], sizes = [8, 96], strides = [1, 1]} : vector<8x128xf32> to vector<8x96xf32>
    %56 = arith.negf %55 : vector<8x96xf32>
    %57 = math.exp %56 : vector<8x96xf32>
    %cst_38 = arith.constant 1.000000e+00 : f32
    %58 = vector.broadcast %cst_38 : f32 to vector<8x96xf32>
    %59 = arith.addf %58, %57 : vector<8x96xf32>
    %60 = arith.divf %58, %59 : vector<8x96xf32>
    %61 = vector.extract_strided_slice %60 {offsets = [0, 0], sizes = [8, 32], strides = [1, 1]} : vector<8x96xf32> to vector<8x32xf32>
    %62 = vector.extract_strided_slice %60 {offsets = [0, 32], sizes = [8, 32], strides = [1, 1]} : vector<8x96xf32> to vector<8x32xf32>
    %63 = vector.extract_strided_slice %60 {offsets = [0, 64], sizes = [8, 32], strides = [1, 1]} : vector<8x96xf32> to vector<8x32xf32>
    %64 = vector.extract_strided_slice %38 {offsets = [0, 96], sizes = [8, 32], strides = [1, 1]} : vector<8x128xf32> to vector<8x32xf32>
    %65 = math.tanh %64 : vector<8x32xf32>
    %66 = arith.mulf %62, %25 : vector<8x32xf32>
    %67 = arith.mulf %61, %65 : vector<8x32xf32>
    %68 = arith.addf %66, %67 : vector<8x32xf32>
    %69 = math.tanh %68 : vector<8x32xf32>
    %70 = arith.mulf %63, %69 : vector<8x32xf32>
    %c1_i32 = arith.constant 1 : i32
    %71 = tpu.concatenate %54, %70 in 1 : vector<8x32xf32>, vector<8x32xf32> -> vector<8x64xf32>
    %cst_39 = arith.constant dense<0.000000e+00> : vector<8x256xf32>
    %72 = tpu.matmul %71, %21, %cst_39 {dimension_numbers = #tpu.dot_dimension_numbers<[1], [0], [0], [1], [0, 0, 1, 1], [], []>} : vector<8x64xf32>, vector<64x256xf32>, vector<8x256xf32> -> vector<8x256xf32>
    %73 = arith.index_cast %c1_i32 : i32 to index
    %c0_40 = arith.constant 0 : index
    %c0_41 = arith.constant 0 : index
    %74 = vector.load %arg13[%73, %c0_40, %c0_41] : memref<8x8x128xf32, #tpu.memory_space<vmem>>, vector<1x8x128xf32>
    %75 = vector.shape_cast %74 : vector<1x8x128xf32> to vector<8x128xf32>
    %76 = vector.extract_strided_slice %72 {offsets = [0, 0], sizes = [8, 128], strides = [1, 1]} : vector<8x256xf32> to vector<8x128xf32>
    %77 = arith.addf %75, %76 : vector<8x128xf32>
    %c7_i32_42 = arith.constant 7 : i32
    %78 = arith.subi %c7_i32_42, %c1_i32 : i32
    %79 = arith.index_cast %78 : i32 to index
    %c0_43 = arith.constant 0 : index
    %c0_44 = arith.constant 0 : index
    %80 = vector.load %arg14[%79, %c0_43, %c0_44] : memref<8x8x128xf32, #tpu.memory_space<vmem>>, vector<1x8x128xf32>
    %81 = vector.shape_cast %80 : vector<1x8x128xf32> to vector<8x128xf32>
    %82 = vector.extract_strided_slice %72 {offsets = [0, 128], sizes = [8, 128], strides = [1, 1]} : vector<8x256xf32> to vector<8x128xf32>
    %83 = arith.addf %81, %82 : vector<8x128xf32>
    %84 = vector.extract_strided_slice %77 {offsets = [0, 0], sizes = [8, 96], strides = [1, 1]} : vector<8x128xf32> to vector<8x96xf32>
    %85 = arith.negf %84 : vector<8x96xf32>
    %86 = math.exp %85 : vector<8x96xf32>
    %cst_45 = arith.constant 1.000000e+00 : f32
    %87 = vector.broadcast %cst_45 : f32 to vector<8x96xf32>
    %88 = arith.addf %87, %86 : vector<8x96xf32>
    %89 = arith.divf %87, %88 : vector<8x96xf32>
    %90 = vector.extract_strided_slice %89 {offsets = [0, 0], sizes = [8, 32], strides = [1, 1]} : vector<8x96xf32> to vector<8x32xf32>
    %91 = vector.extract_strided_slice %89 {offsets = [0, 32], sizes = [8, 32], strides = [1, 1]} : vector<8x96xf32> to vector<8x32xf32>
    %92 = vector.extract_strided_slice %89 {offsets = [0, 64], sizes = [8, 32], strides = [1, 1]} : vector<8x96xf32> to vector<8x32xf32>
    %93 = vector.extract_strided_slice %77 {offsets = [0, 96], sizes = [8, 32], strides = [1, 1]} : vector<8x128xf32> to vector<8x32xf32>
    %94 = math.tanh %93 : vector<8x32xf32>
    %95 = arith.mulf %91, %52 : vector<8x32xf32>
    %96 = arith.mulf %90, %94 : vector<8x32xf32>
    %97 = arith.addf %95, %96 : vector<8x32xf32>
    %98 = math.tanh %97 : vector<8x32xf32>
    %99 = arith.mulf %92, %98 : vector<8x32xf32>
    %100 = vector.extract_strided_slice %83 {offsets = [0, 0], sizes = [8, 96], strides = [1, 1]} : vector<8x128xf32> to vector<8x96xf32>
    %101 = arith.negf %100 : vector<8x96xf32>
    %102 = math.exp %101 : vector<8x96xf32>
    %cst_46 = arith.constant 1.000000e+00 : f32
    %103 = vector.broadcast %cst_46 : f32 to vector<8x96xf32>
    %104 = arith.addf %103, %102 : vector<8x96xf32>
    %105 = arith.divf %103, %104 : vector<8x96xf32>
    %106 = vector.extract_strided_slice %105 {offsets = [0, 0], sizes = [8, 32], strides = [1, 1]} : vector<8x96xf32> to vector<8x32xf32>
    %107 = vector.extract_strided_slice %105 {offsets = [0, 32], sizes = [8, 32], strides = [1, 1]} : vector<8x96xf32> to vector<8x32xf32>
    %108 = vector.extract_strided_slice %105 {offsets = [0, 64], sizes = [8, 32], strides = [1, 1]} : vector<8x96xf32> to vector<8x32xf32>
    %109 = vector.extract_strided_slice %83 {offsets = [0, 96], sizes = [8, 32], strides = [1, 1]} : vector<8x128xf32> to vector<8x32xf32>
    %110 = math.tanh %109 : vector<8x32xf32>
    %111 = arith.mulf %107, %68 : vector<8x32xf32>
    %112 = arith.mulf %106, %110 : vector<8x32xf32>
    %113 = arith.addf %111, %112 : vector<8x32xf32>
    %114 = math.tanh %113 : vector<8x32xf32>
    %115 = arith.mulf %108, %114 : vector<8x32xf32>
    %c2_i32 = arith.constant 2 : i32
    %116 = tpu.concatenate %99, %115 in 1 : vector<8x32xf32>, vector<8x32xf32> -> vector<8x64xf32>
    %cst_47 = arith.constant dense<0.000000e+00> : vector<8x256xf32>
    %117 = tpu.matmul %116, %21, %cst_47 {dimension_numbers = #tpu.dot_dimension_numbers<[1], [0], [0], [1], [0, 0, 1, 1], [], []>} : vector<8x64xf32>, vector<64x256xf32>, vector<8x256xf32> -> vector<8x256xf32>
    %118 = arith.index_cast %c2_i32 : i32 to index
    %c0_48 = arith.constant 0 : index
    %c0_49 = arith.constant 0 : index
    %119 = vector.load %arg13[%118, %c0_48, %c0_49] : memref<8x8x128xf32, #tpu.memory_space<vmem>>, vector<1x8x128xf32>
    %120 = vector.shape_cast %119 : vector<1x8x128xf32> to vector<8x128xf32>
    %121 = vector.extract_strided_slice %117 {offsets = [0, 0], sizes = [8, 128], strides = [1, 1]} : vector<8x256xf32> to vector<8x128xf32>
    %122 = arith.addf %120, %121 : vector<8x128xf32>
    %c7_i32_50 = arith.constant 7 : i32
    %123 = arith.subi %c7_i32_50, %c2_i32 : i32
    %124 = arith.index_cast %123 : i32 to index
    %c0_51 = arith.constant 0 : index
    %c0_52 = arith.constant 0 : index
    %125 = vector.load %arg14[%124, %c0_51, %c0_52] : memref<8x8x128xf32, #tpu.memory_space<vmem>>, vector<1x8x128xf32>
    %126 = vector.shape_cast %125 : vector<1x8x128xf32> to vector<8x128xf32>
    %127 = vector.extract_strided_slice %117 {offsets = [0, 128], sizes = [8, 128], strides = [1, 1]} : vector<8x256xf32> to vector<8x128xf32>
    %128 = arith.addf %126, %127 : vector<8x128xf32>
    %129 = vector.extract_strided_slice %122 {offsets = [0, 0], sizes = [8, 96], strides = [1, 1]} : vector<8x128xf32> to vector<8x96xf32>
    %130 = arith.negf %129 : vector<8x96xf32>
    %131 = math.exp %130 : vector<8x96xf32>
    %cst_53 = arith.constant 1.000000e+00 : f32
    %132 = vector.broadcast %cst_53 : f32 to vector<8x96xf32>
    %133 = arith.addf %132, %131 : vector<8x96xf32>
    %134 = arith.divf %132, %133 : vector<8x96xf32>
    %135 = vector.extract_strided_slice %134 {offsets = [0, 0], sizes = [8, 32], strides = [1, 1]} : vector<8x96xf32> to vector<8x32xf32>
    %136 = vector.extract_strided_slice %134 {offsets = [0, 32], sizes = [8, 32], strides = [1, 1]} : vector<8x96xf32> to vector<8x32xf32>
    %137 = vector.extract_strided_slice %134 {offsets = [0, 64], sizes = [8, 32], strides = [1, 1]} : vector<8x96xf32> to vector<8x32xf32>
    %138 = vector.extract_strided_slice %122 {offsets = [0, 96], sizes = [8, 32], strides = [1, 1]} : vector<8x128xf32> to vector<8x32xf32>
    %139 = math.tanh %138 : vector<8x32xf32>
    %140 = arith.mulf %136, %97 : vector<8x32xf32>
    %141 = arith.mulf %135, %139 : vector<8x32xf32>
    %142 = arith.addf %140, %141 : vector<8x32xf32>
    %143 = math.tanh %142 : vector<8x32xf32>
    %144 = arith.mulf %137, %143 : vector<8x32xf32>
    %145 = vector.extract_strided_slice %128 {offsets = [0, 0], sizes = [8, 96], strides = [1, 1]} : vector<8x128xf32> to vector<8x96xf32>
    %146 = arith.negf %145 : vector<8x96xf32>
    %147 = math.exp %146 : vector<8x96xf32>
    %cst_54 = arith.constant 1.000000e+00 : f32
    %148 = vector.broadcast %cst_54 : f32 to vector<8x96xf32>
    %149 = arith.addf %148, %147 : vector<8x96xf32>
    %150 = arith.divf %148, %149 : vector<8x96xf32>
    %151 = vector.extract_strided_slice %150 {offsets = [0, 0], sizes = [8, 32], strides = [1, 1]} : vector<8x96xf32> to vector<8x32xf32>
    %152 = vector.extract_strided_slice %150 {offsets = [0, 32], sizes = [8, 32], strides = [1, 1]} : vector<8x96xf32> to vector<8x32xf32>
    %153 = vector.extract_strided_slice %150 {offsets = [0, 64], sizes = [8, 32], strides = [1, 1]} : vector<8x96xf32> to vector<8x32xf32>
    %154 = vector.extract_strided_slice %128 {offsets = [0, 96], sizes = [8, 32], strides = [1, 1]} : vector<8x128xf32> to vector<8x32xf32>
    %155 = math.tanh %154 : vector<8x32xf32>
    %156 = arith.mulf %152, %113 : vector<8x32xf32>
    %157 = arith.mulf %151, %155 : vector<8x32xf32>
    %158 = arith.addf %156, %157 : vector<8x32xf32>
    %159 = math.tanh %158 : vector<8x32xf32>
    %160 = arith.mulf %153, %159 : vector<8x32xf32>
    %c3_i32 = arith.constant 3 : i32
    %161 = tpu.concatenate %144, %160 in 1 : vector<8x32xf32>, vector<8x32xf32> -> vector<8x64xf32>
    %cst_55 = arith.constant dense<0.000000e+00> : vector<8x256xf32>
    %162 = tpu.matmul %161, %21, %cst_55 {dimension_numbers = #tpu.dot_dimension_numbers<[1], [0], [0], [1], [0, 0, 1, 1], [], []>} : vector<8x64xf32>, vector<64x256xf32>, vector<8x256xf32> -> vector<8x256xf32>
    %163 = arith.index_cast %c3_i32 : i32 to index
    %c0_56 = arith.constant 0 : index
    %c0_57 = arith.constant 0 : index
    %164 = vector.load %arg13[%163, %c0_56, %c0_57] : memref<8x8x128xf32, #tpu.memory_space<vmem>>, vector<1x8x128xf32>
    %165 = vector.shape_cast %164 : vector<1x8x128xf32> to vector<8x128xf32>
    %166 = vector.extract_strided_slice %162 {offsets = [0, 0], sizes = [8, 128], strides = [1, 1]} : vector<8x256xf32> to vector<8x128xf32>
    %167 = arith.addf %165, %166 : vector<8x128xf32>
    %c7_i32_58 = arith.constant 7 : i32
    %168 = arith.subi %c7_i32_58, %c3_i32 : i32
    %169 = arith.index_cast %168 : i32 to index
    %c0_59 = arith.constant 0 : index
    %c0_60 = arith.constant 0 : index
    %170 = vector.load %arg14[%169, %c0_59, %c0_60] : memref<8x8x128xf32, #tpu.memory_space<vmem>>, vector<1x8x128xf32>
    %171 = vector.shape_cast %170 : vector<1x8x128xf32> to vector<8x128xf32>
    %172 = vector.extract_strided_slice %162 {offsets = [0, 128], sizes = [8, 128], strides = [1, 1]} : vector<8x256xf32> to vector<8x128xf32>
    %173 = arith.addf %171, %172 : vector<8x128xf32>
    %174 = vector.extract_strided_slice %167 {offsets = [0, 0], sizes = [8, 96], strides = [1, 1]} : vector<8x128xf32> to vector<8x96xf32>
    %175 = arith.negf %174 : vector<8x96xf32>
    %176 = math.exp %175 : vector<8x96xf32>
    %cst_61 = arith.constant 1.000000e+00 : f32
    %177 = vector.broadcast %cst_61 : f32 to vector<8x96xf32>
    %178 = arith.addf %177, %176 : vector<8x96xf32>
    %179 = arith.divf %177, %178 : vector<8x96xf32>
    %180 = vector.extract_strided_slice %179 {offsets = [0, 0], sizes = [8, 32], strides = [1, 1]} : vector<8x96xf32> to vector<8x32xf32>
    %181 = vector.extract_strided_slice %179 {offsets = [0, 32], sizes = [8, 32], strides = [1, 1]} : vector<8x96xf32> to vector<8x32xf32>
    %182 = vector.extract_strided_slice %179 {offsets = [0, 64], sizes = [8, 32], strides = [1, 1]} : vector<8x96xf32> to vector<8x32xf32>
    %183 = vector.extract_strided_slice %167 {offsets = [0, 96], sizes = [8, 32], strides = [1, 1]} : vector<8x128xf32> to vector<8x32xf32>
    %184 = math.tanh %183 : vector<8x32xf32>
    %185 = arith.mulf %181, %142 : vector<8x32xf32>
    %186 = arith.mulf %180, %184 : vector<8x32xf32>
    %187 = arith.addf %185, %186 : vector<8x32xf32>
    %188 = math.tanh %187 : vector<8x32xf32>
    %189 = arith.mulf %182, %188 : vector<8x32xf32>
    %190 = vector.extract_strided_slice %173 {offsets = [0, 0], sizes = [8, 96], strides = [1, 1]} : vector<8x128xf32> to vector<8x96xf32>
    %191 = arith.negf %190 : vector<8x96xf32>
    %192 = math.exp %191 : vector<8x96xf32>
    %cst_62 = arith.constant 1.000000e+00 : f32
    %193 = vector.broadcast %cst_62 : f32 to vector<8x96xf32>
    %194 = arith.addf %193, %192 : vector<8x96xf32>
    %195 = arith.divf %193, %194 : vector<8x96xf32>
    %196 = vector.extract_strided_slice %195 {offsets = [0, 0], sizes = [8, 32], strides = [1, 1]} : vector<8x96xf32> to vector<8x32xf32>
    %197 = vector.extract_strided_slice %195 {offsets = [0, 32], sizes = [8, 32], strides = [1, 1]} : vector<8x96xf32> to vector<8x32xf32>
    %198 = vector.extract_strided_slice %195 {offsets = [0, 64], sizes = [8, 32], strides = [1, 1]} : vector<8x96xf32> to vector<8x32xf32>
    %199 = vector.extract_strided_slice %173 {offsets = [0, 96], sizes = [8, 32], strides = [1, 1]} : vector<8x128xf32> to vector<8x32xf32>
    %200 = math.tanh %199 : vector<8x32xf32>
    %201 = arith.mulf %197, %158 : vector<8x32xf32>
    %202 = arith.mulf %196, %200 : vector<8x32xf32>
    %203 = arith.addf %201, %202 : vector<8x32xf32>
    %204 = math.tanh %203 : vector<8x32xf32>
    %205 = arith.mulf %198, %204 : vector<8x32xf32>
    %c4_i32 = arith.constant 4 : i32
    %206 = tpu.concatenate %189, %205 in 1 : vector<8x32xf32>, vector<8x32xf32> -> vector<8x64xf32>
    %cst_63 = arith.constant dense<0.000000e+00> : vector<8x256xf32>
    %207 = tpu.matmul %206, %21, %cst_63 {dimension_numbers = #tpu.dot_dimension_numbers<[1], [0], [0], [1], [0, 0, 1, 1], [], []>} : vector<8x64xf32>, vector<64x256xf32>, vector<8x256xf32> -> vector<8x256xf32>
    %208 = arith.index_cast %c4_i32 : i32 to index
    %c0_64 = arith.constant 0 : index
    %c0_65 = arith.constant 0 : index
    %209 = vector.load %arg13[%208, %c0_64, %c0_65] : memref<8x8x128xf32, #tpu.memory_space<vmem>>, vector<1x8x128xf32>
    %210 = vector.shape_cast %209 : vector<1x8x128xf32> to vector<8x128xf32>
    %211 = vector.extract_strided_slice %207 {offsets = [0, 0], sizes = [8, 128], strides = [1, 1]} : vector<8x256xf32> to vector<8x128xf32>
    %212 = arith.addf %210, %211 : vector<8x128xf32>
    %c7_i32_66 = arith.constant 7 : i32
    %213 = arith.subi %c7_i32_66, %c4_i32 : i32
    %214 = arith.index_cast %213 : i32 to index
    %c0_67 = arith.constant 0 : index
    %c0_68 = arith.constant 0 : index
    %215 = vector.load %arg14[%214, %c0_67, %c0_68] : memref<8x8x128xf32, #tpu.memory_space<vmem>>, vector<1x8x128xf32>
    %216 = vector.shape_cast %215 : vector<1x8x128xf32> to vector<8x128xf32>
    %217 = vector.extract_strided_slice %207 {offsets = [0, 128], sizes = [8, 128], strides = [1, 1]} : vector<8x256xf32> to vector<8x128xf32>
    %218 = arith.addf %216, %217 : vector<8x128xf32>
    %219 = vector.extract_strided_slice %212 {offsets = [0, 0], sizes = [8, 96], strides = [1, 1]} : vector<8x128xf32> to vector<8x96xf32>
    %220 = arith.negf %219 : vector<8x96xf32>
    %221 = math.exp %220 : vector<8x96xf32>
    %cst_69 = arith.constant 1.000000e+00 : f32
    %222 = vector.broadcast %cst_69 : f32 to vector<8x96xf32>
    %223 = arith.addf %222, %221 : vector<8x96xf32>
    %224 = arith.divf %222, %223 : vector<8x96xf32>
    %225 = vector.extract_strided_slice %224 {offsets = [0, 0], sizes = [8, 32], strides = [1, 1]} : vector<8x96xf32> to vector<8x32xf32>
    %226 = vector.extract_strided_slice %224 {offsets = [0, 32], sizes = [8, 32], strides = [1, 1]} : vector<8x96xf32> to vector<8x32xf32>
    %227 = vector.extract_strided_slice %224 {offsets = [0, 64], sizes = [8, 32], strides = [1, 1]} : vector<8x96xf32> to vector<8x32xf32>
    %228 = vector.extract_strided_slice %212 {offsets = [0, 96], sizes = [8, 32], strides = [1, 1]} : vector<8x128xf32> to vector<8x32xf32>
    %229 = math.tanh %228 : vector<8x32xf32>
    %230 = arith.mulf %226, %187 : vector<8x32xf32>
    %231 = arith.mulf %225, %229 : vector<8x32xf32>
    %232 = arith.addf %230, %231 : vector<8x32xf32>
    %233 = math.tanh %232 : vector<8x32xf32>
    %234 = arith.mulf %227, %233 : vector<8x32xf32>
    %235 = vector.extract_strided_slice %218 {offsets = [0, 0], sizes = [8, 96], strides = [1, 1]} : vector<8x128xf32> to vector<8x96xf32>
    %236 = arith.negf %235 : vector<8x96xf32>
    %237 = math.exp %236 : vector<8x96xf32>
    %cst_70 = arith.constant 1.000000e+00 : f32
    %238 = vector.broadcast %cst_70 : f32 to vector<8x96xf32>
    %239 = arith.addf %238, %237 : vector<8x96xf32>
    %240 = arith.divf %238, %239 : vector<8x96xf32>
    %241 = vector.extract_strided_slice %240 {offsets = [0, 0], sizes = [8, 32], strides = [1, 1]} : vector<8x96xf32> to vector<8x32xf32>
    %242 = vector.extract_strided_slice %240 {offsets = [0, 32], sizes = [8, 32], strides = [1, 1]} : vector<8x96xf32> to vector<8x32xf32>
    %243 = vector.extract_strided_slice %240 {offsets = [0, 64], sizes = [8, 32], strides = [1, 1]} : vector<8x96xf32> to vector<8x32xf32>
    %244 = vector.extract_strided_slice %218 {offsets = [0, 96], sizes = [8, 32], strides = [1, 1]} : vector<8x128xf32> to vector<8x32xf32>
    %245 = math.tanh %244 : vector<8x32xf32>
    %246 = arith.mulf %242, %203 : vector<8x32xf32>
    %247 = arith.mulf %241, %245 : vector<8x32xf32>
    %248 = arith.addf %246, %247 : vector<8x32xf32>
    %249 = math.tanh %248 : vector<8x32xf32>
    %250 = arith.mulf %243, %249 : vector<8x32xf32>
    %c5_i32 = arith.constant 5 : i32
    %251 = tpu.concatenate %234, %250 in 1 : vector<8x32xf32>, vector<8x32xf32> -> vector<8x64xf32>
    %cst_71 = arith.constant dense<0.000000e+00> : vector<8x256xf32>
    %252 = tpu.matmul %251, %21, %cst_71 {dimension_numbers = #tpu.dot_dimension_numbers<[1], [0], [0], [1], [0, 0, 1, 1], [], []>} : vector<8x64xf32>, vector<64x256xf32>, vector<8x256xf32> -> vector<8x256xf32>
    %253 = arith.index_cast %c5_i32 : i32 to index
    %c0_72 = arith.constant 0 : index
    %c0_73 = arith.constant 0 : index
    %254 = vector.load %arg13[%253, %c0_72, %c0_73] : memref<8x8x128xf32, #tpu.memory_space<vmem>>, vector<1x8x128xf32>
    %255 = vector.shape_cast %254 : vector<1x8x128xf32> to vector<8x128xf32>
    %256 = vector.extract_strided_slice %252 {offsets = [0, 0], sizes = [8, 128], strides = [1, 1]} : vector<8x256xf32> to vector<8x128xf32>
    %257 = arith.addf %255, %256 : vector<8x128xf32>
    %c7_i32_74 = arith.constant 7 : i32
    %258 = arith.subi %c7_i32_74, %c5_i32 : i32
    %259 = arith.index_cast %258 : i32 to index
    %c0_75 = arith.constant 0 : index
    %c0_76 = arith.constant 0 : index
    %260 = vector.load %arg14[%259, %c0_75, %c0_76] : memref<8x8x128xf32, #tpu.memory_space<vmem>>, vector<1x8x128xf32>
    %261 = vector.shape_cast %260 : vector<1x8x128xf32> to vector<8x128xf32>
    %262 = vector.extract_strided_slice %252 {offsets = [0, 128], sizes = [8, 128], strides = [1, 1]} : vector<8x256xf32> to vector<8x128xf32>
    %263 = arith.addf %261, %262 : vector<8x128xf32>
    %264 = vector.extract_strided_slice %257 {offsets = [0, 0], sizes = [8, 96], strides = [1, 1]} : vector<8x128xf32> to vector<8x96xf32>
    %265 = arith.negf %264 : vector<8x96xf32>
    %266 = math.exp %265 : vector<8x96xf32>
    %cst_77 = arith.constant 1.000000e+00 : f32
    %267 = vector.broadcast %cst_77 : f32 to vector<8x96xf32>
    %268 = arith.addf %267, %266 : vector<8x96xf32>
    %269 = arith.divf %267, %268 : vector<8x96xf32>
    %270 = vector.extract_strided_slice %269 {offsets = [0, 0], sizes = [8, 32], strides = [1, 1]} : vector<8x96xf32> to vector<8x32xf32>
    %271 = vector.extract_strided_slice %269 {offsets = [0, 32], sizes = [8, 32], strides = [1, 1]} : vector<8x96xf32> to vector<8x32xf32>
    %272 = vector.extract_strided_slice %269 {offsets = [0, 64], sizes = [8, 32], strides = [1, 1]} : vector<8x96xf32> to vector<8x32xf32>
    %273 = vector.extract_strided_slice %257 {offsets = [0, 96], sizes = [8, 32], strides = [1, 1]} : vector<8x128xf32> to vector<8x32xf32>
    %274 = math.tanh %273 : vector<8x32xf32>
    %275 = arith.mulf %271, %232 : vector<8x32xf32>
    %276 = arith.mulf %270, %274 : vector<8x32xf32>
    %277 = arith.addf %275, %276 : vector<8x32xf32>
    %278 = math.tanh %277 : vector<8x32xf32>
    %279 = arith.mulf %272, %278 : vector<8x32xf32>
    %280 = vector.extract_strided_slice %263 {offsets = [0, 0], sizes = [8, 96], strides = [1, 1]} : vector<8x128xf32> to vector<8x96xf32>
    %281 = arith.negf %280 : vector<8x96xf32>
    %282 = math.exp %281 : vector<8x96xf32>
    %cst_78 = arith.constant 1.000000e+00 : f32
    %283 = vector.broadcast %cst_78 : f32 to vector<8x96xf32>
    %284 = arith.addf %283, %282 : vector<8x96xf32>
    %285 = arith.divf %283, %284 : vector<8x96xf32>
    %286 = vector.extract_strided_slice %285 {offsets = [0, 0], sizes = [8, 32], strides = [1, 1]} : vector<8x96xf32> to vector<8x32xf32>
    %287 = vector.extract_strided_slice %285 {offsets = [0, 32], sizes = [8, 32], strides = [1, 1]} : vector<8x96xf32> to vector<8x32xf32>
    %288 = vector.extract_strided_slice %285 {offsets = [0, 64], sizes = [8, 32], strides = [1, 1]} : vector<8x96xf32> to vector<8x32xf32>
    %289 = vector.extract_strided_slice %263 {offsets = [0, 96], sizes = [8, 32], strides = [1, 1]} : vector<8x128xf32> to vector<8x32xf32>
    %290 = math.tanh %289 : vector<8x32xf32>
    %291 = arith.mulf %287, %248 : vector<8x32xf32>
    %292 = arith.mulf %286, %290 : vector<8x32xf32>
    %293 = arith.addf %291, %292 : vector<8x32xf32>
    %294 = math.tanh %293 : vector<8x32xf32>
    %295 = arith.mulf %288, %294 : vector<8x32xf32>
    %c6_i32 = arith.constant 6 : i32
    %296 = tpu.concatenate %279, %295 in 1 : vector<8x32xf32>, vector<8x32xf32> -> vector<8x64xf32>
    %cst_79 = arith.constant dense<0.000000e+00> : vector<8x256xf32>
    %297 = tpu.matmul %296, %21, %cst_79 {dimension_numbers = #tpu.dot_dimension_numbers<[1], [0], [0], [1], [0, 0, 1, 1], [], []>} : vector<8x64xf32>, vector<64x256xf32>, vector<8x256xf32> -> vector<8x256xf32>
    %298 = arith.index_cast %c6_i32 : i32 to index
    %c0_80 = arith.constant 0 : index
    %c0_81 = arith.constant 0 : index
    %299 = vector.load %arg13[%298, %c0_80, %c0_81] : memref<8x8x128xf32, #tpu.memory_space<vmem>>, vector<1x8x128xf32>
    %300 = vector.shape_cast %299 : vector<1x8x128xf32> to vector<8x128xf32>
    %301 = vector.extract_strided_slice %297 {offsets = [0, 0], sizes = [8, 128], strides = [1, 1]} : vector<8x256xf32> to vector<8x128xf32>
    %302 = arith.addf %300, %301 : vector<8x128xf32>
    %c7_i32_82 = arith.constant 7 : i32
    %303 = arith.subi %c7_i32_82, %c6_i32 : i32
    %304 = arith.index_cast %303 : i32 to index
    %c0_83 = arith.constant 0 : index
    %c0_84 = arith.constant 0 : index
    %305 = vector.load %arg14[%304, %c0_83, %c0_84] : memref<8x8x128xf32, #tpu.memory_space<vmem>>, vector<1x8x128xf32>
    %306 = vector.shape_cast %305 : vector<1x8x128xf32> to vector<8x128xf32>
    %307 = vector.extract_strided_slice %297 {offsets = [0, 128], sizes = [8, 128], strides = [1, 1]} : vector<8x256xf32> to vector<8x128xf32>
    %308 = arith.addf %306, %307 : vector<8x128xf32>
    %309 = vector.extract_strided_slice %302 {offsets = [0, 0], sizes = [8, 96], strides = [1, 1]} : vector<8x128xf32> to vector<8x96xf32>
    %310 = arith.negf %309 : vector<8x96xf32>
    %311 = math.exp %310 : vector<8x96xf32>
    %cst_85 = arith.constant 1.000000e+00 : f32
    %312 = vector.broadcast %cst_85 : f32 to vector<8x96xf32>
    %313 = arith.addf %312, %311 : vector<8x96xf32>
    %314 = arith.divf %312, %313 : vector<8x96xf32>
    %315 = vector.extract_strided_slice %314 {offsets = [0, 0], sizes = [8, 32], strides = [1, 1]} : vector<8x96xf32> to vector<8x32xf32>
    %316 = vector.extract_strided_slice %314 {offsets = [0, 32], sizes = [8, 32], strides = [1, 1]} : vector<8x96xf32> to vector<8x32xf32>
    %317 = vector.extract_strided_slice %314 {offsets = [0, 64], sizes = [8, 32], strides = [1, 1]} : vector<8x96xf32> to vector<8x32xf32>
    %318 = vector.extract_strided_slice %302 {offsets = [0, 96], sizes = [8, 32], strides = [1, 1]} : vector<8x128xf32> to vector<8x32xf32>
    %319 = math.tanh %318 : vector<8x32xf32>
    %320 = arith.mulf %316, %277 : vector<8x32xf32>
    %321 = arith.mulf %315, %319 : vector<8x32xf32>
    %322 = arith.addf %320, %321 : vector<8x32xf32>
    %323 = math.tanh %322 : vector<8x32xf32>
    %324 = arith.mulf %317, %323 : vector<8x32xf32>
    %325 = vector.extract_strided_slice %308 {offsets = [0, 0], sizes = [8, 96], strides = [1, 1]} : vector<8x128xf32> to vector<8x96xf32>
    %326 = arith.negf %325 : vector<8x96xf32>
    %327 = math.exp %326 : vector<8x96xf32>
    %cst_86 = arith.constant 1.000000e+00 : f32
    %328 = vector.broadcast %cst_86 : f32 to vector<8x96xf32>
    %329 = arith.addf %328, %327 : vector<8x96xf32>
    %330 = arith.divf %328, %329 : vector<8x96xf32>
    %331 = vector.extract_strided_slice %330 {offsets = [0, 0], sizes = [8, 32], strides = [1, 1]} : vector<8x96xf32> to vector<8x32xf32>
    %332 = vector.extract_strided_slice %330 {offsets = [0, 32], sizes = [8, 32], strides = [1, 1]} : vector<8x96xf32> to vector<8x32xf32>
    %333 = vector.extract_strided_slice %330 {offsets = [0, 64], sizes = [8, 32], strides = [1, 1]} : vector<8x96xf32> to vector<8x32xf32>
    %334 = vector.extract_strided_slice %308 {offsets = [0, 96], sizes = [8, 32], strides = [1, 1]} : vector<8x128xf32> to vector<8x32xf32>
    %335 = math.tanh %334 : vector<8x32xf32>
    %336 = arith.mulf %332, %293 : vector<8x32xf32>
    %337 = arith.mulf %331, %335 : vector<8x32xf32>
    %338 = arith.addf %336, %337 : vector<8x32xf32>
    %339 = math.tanh %338 : vector<8x32xf32>
    %340 = arith.mulf %333, %339 : vector<8x32xf32>
    %c7_i32_87 = arith.constant 7 : i32
    %341 = tpu.concatenate %324, %340 in 1 : vector<8x32xf32>, vector<8x32xf32> -> vector<8x64xf32>
    %cst_88 = arith.constant dense<0.000000e+00> : vector<8x256xf32>
    %342 = tpu.matmul %341, %21, %cst_88 {dimension_numbers = #tpu.dot_dimension_numbers<[1], [0], [0], [1], [0, 0, 1, 1], [], []>} : vector<8x64xf32>, vector<64x256xf32>, vector<8x256xf32> -> vector<8x256xf32>
    %343 = arith.index_cast %c7_i32_87 : i32 to index
    %c0_89 = arith.constant 0 : index
    %c0_90 = arith.constant 0 : index
    %344 = vector.load %arg13[%343, %c0_89, %c0_90] : memref<8x8x128xf32, #tpu.memory_space<vmem>>, vector<1x8x128xf32>
    %345 = vector.shape_cast %344 : vector<1x8x128xf32> to vector<8x128xf32>
    %346 = vector.extract_strided_slice %342 {offsets = [0, 0], sizes = [8, 128], strides = [1, 1]} : vector<8x256xf32> to vector<8x128xf32>
    %347 = arith.addf %345, %346 : vector<8x128xf32>
    %c7_i32_91 = arith.constant 7 : i32
    %348 = arith.subi %c7_i32_91, %c7_i32_87 : i32
    %349 = arith.index_cast %348 : i32 to index
    %c0_92 = arith.constant 0 : index
    %c0_93 = arith.constant 0 : index
    %350 = vector.load %arg14[%349, %c0_92, %c0_93] : memref<8x8x128xf32, #tpu.memory_space<vmem>>, vector<1x8x128xf32>
    %351 = vector.shape_cast %350 : vector<1x8x128xf32> to vector<8x128xf32>
    %352 = vector.extract_strided_slice %342 {offsets = [0, 128], sizes = [8, 128], strides = [1, 1]} : vector<8x256xf32> to vector<8x128xf32>
    %353 = arith.addf %351, %352 : vector<8x128xf32>
    %354 = vector.extract_strided_slice %347 {offsets = [0, 0], sizes = [8, 96], strides = [1, 1]} : vector<8x128xf32> to vector<8x96xf32>
    %355 = arith.negf %354 : vector<8x96xf32>
    %356 = math.exp %355 : vector<8x96xf32>
    %cst_94 = arith.constant 1.000000e+00 : f32
    %357 = vector.broadcast %cst_94 : f32 to vector<8x96xf32>
    %358 = arith.addf %357, %356 : vector<8x96xf32>
    %359 = arith.divf %357, %358 : vector<8x96xf32>
    %360 = vector.extract_strided_slice %359 {offsets = [0, 0], sizes = [8, 32], strides = [1, 1]} : vector<8x96xf32> to vector<8x32xf32>
    %361 = vector.extract_strided_slice %359 {offsets = [0, 32], sizes = [8, 32], strides = [1, 1]} : vector<8x96xf32> to vector<8x32xf32>
    %362 = vector.extract_strided_slice %359 {offsets = [0, 64], sizes = [8, 32], strides = [1, 1]} : vector<8x96xf32> to vector<8x32xf32>
    %363 = vector.extract_strided_slice %347 {offsets = [0, 96], sizes = [8, 32], strides = [1, 1]} : vector<8x128xf32> to vector<8x32xf32>
    %364 = math.tanh %363 : vector<8x32xf32>
    %365 = arith.mulf %361, %322 : vector<8x32xf32>
    %366 = arith.mulf %360, %364 : vector<8x32xf32>
    %367 = arith.addf %365, %366 : vector<8x32xf32>
    %368 = math.tanh %367 : vector<8x32xf32>
    %369 = arith.mulf %362, %368 : vector<8x32xf32>
    %370 = vector.extract_strided_slice %353 {offsets = [0, 0], sizes = [8, 96], strides = [1, 1]} : vector<8x128xf32> to vector<8x96xf32>
    %371 = arith.negf %370 : vector<8x96xf32>
    %372 = math.exp %371 : vector<8x96xf32>
    %cst_95 = arith.constant 1.000000e+00 : f32
    %373 = vector.broadcast %cst_95 : f32 to vector<8x96xf32>
    %374 = arith.addf %373, %372 : vector<8x96xf32>
    %375 = arith.divf %373, %374 : vector<8x96xf32>
    %376 = vector.extract_strided_slice %375 {offsets = [0, 0], sizes = [8, 32], strides = [1, 1]} : vector<8x96xf32> to vector<8x32xf32>
    %377 = vector.extract_strided_slice %375 {offsets = [0, 32], sizes = [8, 32], strides = [1, 1]} : vector<8x96xf32> to vector<8x32xf32>
    %378 = vector.extract_strided_slice %375 {offsets = [0, 64], sizes = [8, 32], strides = [1, 1]} : vector<8x96xf32> to vector<8x32xf32>
    %379 = vector.extract_strided_slice %353 {offsets = [0, 96], sizes = [8, 32], strides = [1, 1]} : vector<8x128xf32> to vector<8x32xf32>
    %380 = math.tanh %379 : vector<8x32xf32>
    %381 = arith.mulf %377, %338 : vector<8x32xf32>
    %382 = arith.mulf %376, %380 : vector<8x32xf32>
    %383 = arith.addf %381, %382 : vector<8x32xf32>
    %384 = math.tanh %383 : vector<8x32xf32>
    %385 = arith.mulf %378, %384 : vector<8x32xf32>
    %c8_i32 = arith.constant 8 : i32
    %c0_96 = arith.constant 0 : index
    %c0_97 = arith.constant 0 : index
    %386 = vector.load %arg15[%c0_96, %c0_97] : memref<8x32xf32, #tpu.memory_space<vmem>>, vector<8x32xf32>
    tpu.vector_store %arg15[%c0_96, %c0_97], %369 {strides = array<i32>} : memref<8x32xf32, #tpu.memory_space<vmem>>, vector<8x32xf32>,
    %c0_98 = arith.constant 0 : index
    %c0_99 = arith.constant 0 : index
    %387 = vector.load %arg16[%c0_98, %c0_99] : memref<8x32xf32, #tpu.memory_space<vmem>>, vector<8x32xf32>
    tpu.vector_store %arg16[%c0_98, %c0_99], %367 {strides = array<i32>} : memref<8x32xf32, #tpu.memory_space<vmem>>, vector<8x32xf32>,
    %c0_100 = arith.constant 0 : index
    %c0_101 = arith.constant 0 : index
    %388 = vector.load %arg17[%c0_100, %c0_101] : memref<8x32xf32, #tpu.memory_space<vmem>>, vector<8x32xf32>
    tpu.vector_store %arg17[%c0_100, %c0_101], %385 {strides = array<i32>} : memref<8x32xf32, #tpu.memory_space<vmem>>, vector<8x32xf32>,
    %c0_102 = arith.constant 0 : index
    %c0_103 = arith.constant 0 : index
    %389 = vector.load %arg18[%c0_102, %c0_103] : memref<8x32xf32, #tpu.memory_space<vmem>>, vector<8x32xf32>
    tpu.vector_store %arg18[%c0_102, %c0_103], %383 {strides = array<i32>} : memref<8x32xf32, #tpu.memory_space<vmem>>, vector<8x32xf32>,
    %c0_i32_104 = arith.constant 0 : i32
    %390 = arith.cmpi eq, %arg1, %c0_i32_104 : i32
    %391 = arith.extui %390 : i1 to i32
    %c0_i32_105 = arith.constant 0 : i32
    %392 = arith.cmpi ne, %391, %c0_i32_105 : i32
    scf.if %392 {
      %c0_106 = arith.constant 0 : index
      %c0_107 = arith.constant 0 : index
      %393 = vector.load %arg9[%c0_106, %c0_107] : memref<32x4xf32, #tpu.memory_space<vmem>>, vector<32x4xf32>
      %cst_108 = arith.constant dense<0.000000e+00> : vector<8x4xf32>
      %394 = tpu.matmul %369, %393, %cst_108 {dimension_numbers = #tpu.dot_dimension_numbers<[1], [0], [0], [1], [0, 0, 1, 1], [], []>} : vector<8x32xf32>, vector<32x4xf32>, vector<8x4xf32> -> vector<8x4xf32>
      %c0_109 = arith.constant 0 : index
      %c0_110 = arith.constant 0 : index
      %395 = vector.load %arg10[%c0_109, %c0_110] : memref<32x4xf32, #tpu.memory_space<vmem>>, vector<32x4xf32>
      %cst_111 = arith.constant dense<0.000000e+00> : vector<8x4xf32>
      %396 = tpu.matmul %385, %395, %cst_111 {dimension_numbers = #tpu.dot_dimension_numbers<[1], [0], [0], [1], [0, 0, 1, 1], [], []>} : vector<8x32xf32>, vector<32x4xf32>, vector<8x4xf32> -> vector<8x4xf32>
      %397 = arith.addf %394, %396 : vector<8x4xf32>
      %c0_112 = arith.constant 0 : index
      %c0_113 = arith.constant 0 : index
      %398 = vector.load %arg11[%c0_112, %c0_113] : memref<1x4xf32, #tpu.memory_space<vmem>>, vector<1x4xf32>
      %399 = vector.broadcast %398 : vector<1x4xf32> to vector<8x4xf32>
      %400 = arith.addf %397, %399 : vector<8x4xf32>
      %c0_114 = arith.constant 0 : index
      %c0_115 = arith.constant 0 : index
      %401 = vector.load %arg12[%c0_114, %c0_115] : memref<8x4xf32, #tpu.memory_space<vmem>>, vector<8x4xf32>
      tpu.vector_store %arg12[%c0_114, %c0_115], %400 {strides = array<i32>} : memref<8x4xf32, #tpu.memory_space<vmem>>, vector<8x4xf32>,
    } else {
    }
    return
  }
  func.func @transform_0(%arg0: i32, %arg1: i32) -> (i32, i32, i32) {
    %c0_i32 = arith.constant 0 : i32
    %c0_i32_0 = arith.constant 0 : i32
    return %arg1, %arg0, %c0_i32 : i32, i32, i32
  }
  func.func @transform_1(%arg0: i32, %arg1: i32) -> (i32, i32, i32) {
    %c0_i32 = arith.constant 0 : i32
    %0 = arith.subi %c0_i32, %arg1 : i32
    %c0_i32_0 = arith.constant 0 : i32
    %c0_i32_1 = arith.constant 0 : i32
    return %0, %arg0, %c0_i32_0 : i32, i32, i32
  }
  func.func @transform_2(%arg0: i32, %arg1: i32) -> (i32, i32) {
    %c0_i32 = arith.constant 0 : i32
    %c0_i32_0 = arith.constant 0 : i32
    %c0_i32_1 = arith.constant 0 : i32
    return %c0_i32, %c0_i32_0 : i32, i32
  }
  func.func @transform_3(%arg0: i32, %arg1: i32) -> (i32, i32) {
    %c0_i32 = arith.constant 0 : i32
    %c0_i32_0 = arith.constant 0 : i32
    %c0_i32_1 = arith.constant 0 : i32
    return %c0_i32, %c0_i32_0 : i32, i32
  }
  func.func @transform_4(%arg0: i32, %arg1: i32) -> (i32, i32) {
    %c0_i32 = arith.constant 0 : i32
    %c0_i32_0 = arith.constant 0 : i32
    %c0_i32_1 = arith.constant 0 : i32
    return %c0_i32, %c0_i32_0 : i32, i32
  }
  func.func @transform_5(%arg0: i32, %arg1: i32) -> (i32, i32) {
    %c0_i32 = arith.constant 0 : i32
    %c0_i32_0 = arith.constant 0 : i32
    %c0_i32_1 = arith.constant 0 : i32
    return %c0_i32, %c0_i32_0 : i32, i32
  }
  func.func @transform_6(%arg0: i32, %arg1: i32) -> (i32, i32) {
    %c0_i32 = arith.constant 0 : i32
    %c0_i32_0 = arith.constant 0 : i32
    %c0_i32_1 = arith.constant 0 : i32
    return %c0_i32, %c0_i32_0 : i32, i32
  }
  func.func @transform_7(%arg0: i32, %arg1: i32) -> (i32, i32) {
    %c0_i32 = arith.constant 0 : i32
    %c0_i32_0 = arith.constant 0 : i32
    %c0_i32_1 = arith.constant 0 : i32
    return %c0_i32, %c0_i32_0 : i32, i32
  }
  func.func @transform_8(%arg0: i32, %arg1: i32) -> (i32, i32) {
    %c0_i32 = arith.constant 0 : i32
    %c0_i32_0 = arith.constant 0 : i32
    %c0_i32_1 = arith.constant 0 : i32
    return %c0_i32, %c0_i32_0 : i32, i32
  }
  func.func @transform_9(%arg0: i32, %arg1: i32) -> (i32, i32) {
    %c0_i32 = arith.constant 0 : i32
    %c0_i32_0 = arith.constant 0 : i32
    %c0_i32_1 = arith.constant 0 : i32
    return %c0_i32, %c0_i32_0 : i32, i32
  }
  func.func @transform_10(%arg0: i32, %arg1: i32) -> (i32, i32) {
    %c0_i32 = arith.constant 0 : i32
    %c0_i32_0 = arith.constant 0 : i32
    return %arg0, %c0_i32 : i32, i32
  }
}

</mosaic_0001>

<llo_original>
// kernel: bilstm_model_forward.1
$region0: #{bilstm_model_forward.1}
  #allocation0 [shape = 'u32[]', space=smem, size = 0x4, offset = 0x4, fixed_abs, tag = 'smem constant byte address 0x4 - core index']
  #allocation1 [shape = 'u32[144,128]{1,0:T(1,128)}', space=vmem, size = 0x12000, scoped, tag = 'internal scratch']
  #allocation2 [shape = 'f32[8,8,128]{2,1,0:T(8,128)}', space=vmem, size = 0x8000, scoped, tag = 'scratch operand']
  #allocation3 [shape = 'f32[8,8,128]{2,1,0:T(8,128)}', space=vmem, size = 0x8000, scoped, tag = 'scratch operand']
  #allocation4 [shape = 'f32[8,32]{1,0:T(8,128)}', space=vmem, size = 0x1000, scoped, tag = 'scratch operand']
  #allocation5 [shape = 'f32[8,32]{1,0:T(8,128)}', space=vmem, size = 0x1000, scoped, tag = 'scratch operand']
  #allocation6 [shape = 'f32[8,32]{1,0:T(8,128)}', space=vmem, size = 0x1000, scoped, tag = 'scratch operand']
  #allocation7 [shape = 'f32[8,32]{1,0:T(8,128)}', space=vmem, size = 0x1000, scoped, tag = 'scratch operand']
  %s0 = inlined_call_operand.vmem [shape: f32[8,8,16], index: 0, kind: input, shape index: {}, may-alias: {0,1}]
  %s1 = inlined_call_operand.vmem [shape: f32[8,8,16], index: 1, kind: input, shape index: {}, may-alias: {0,1}]
  %s2 = inlined_call_operand.vmem [shape: f32[16,128], index: 2, kind: input, shape index: {}]
  %s3 = inlined_call_operand.vmem [shape: f32[16,128], index: 3, kind: input, shape index: {}]
  %s4 = inlined_call_operand.vmem [shape: f32[1,128], index: 4, kind: input, shape index: {}]
  %s5 = inlined_call_operand.vmem [shape: f32[1,128], index: 5, kind: input, shape index: {}]
  %s6 = inlined_call_operand.vmem [shape: f32[64,256], index: 6, kind: input, shape index: {}]
  %s7 = inlined_call_operand.vmem [shape: f32[32,4], index: 7, kind: input, shape index: {}]
  %s8 = inlined_call_operand.vmem [shape: f32[32,4], index: 8, kind: input, shape index: {}]
  %s9 = inlined_call_operand.vmem [shape: f32[1,4], index: 9, kind: input, shape index: {}]
  %s10 = inlined_call_operand.vmem [shape: f32[8,4], index: 10, kind: output, shape index: {}]
  %s11 = sld [smem:[#allocation0]]
  $region58: #{bilstm_model_forward.1} parent=0
    _
  %s13 = ssub.s32 1, %s11
  %s14 = scalar_select 0, %s13, %s11
  // Predicated region
  $region2: #{bilstm_model_forward.1} parent=0 // pred_check
    _
  $region3: #{bilstm_model_forward.1} parent=0 // pred_check_branch
    %16 = sbr.rel (0) target = $region5
  $region4: #{bilstm_model_forward.1} parent=0 // pred_region
    _
  $region5: #{bilstm_model_forward.1} parent=0 // pred_fallthru
    _
  // Predicated region
  $region6: #{bilstm_model_forward.1} parent=0 // pred_check
    _
  $region7: #{bilstm_model_forward.1} parent=0 // pred_check_branch
    %18 = sbr.rel (0) target = $region9
  $region8: #{bilstm_model_forward.1} parent=0 // pred_region
    %s19 = ssub.s32 0, 0
    %s20 = smul.u32 8, %s19
    %p21 = scmp.lt.s32.totalorder %s20, 7
    %s22 = scalar_select %p21, %s20, 7
    %s23 = smul.addr %s22, 8
    %s24 = scalar_lea.vmem %s1, %s23
    %s25 = ssub.s32 0, 0
    %s26 = smul.u32 8, %s25
  $region9: #{bilstm_model_forward.1} parent=0 // pred_fallthru
    _
  // Predicated region
  $region10: #{bilstm_model_forward.1} parent=0 // pred_check
    _
  $region11: #{bilstm_model_forward.1} parent=0 // pred_check_branch
    %28 = sbr.rel (0) target = $region13
  $region12: #{bilstm_model_forward.1} parent=0 // pred_region
    _
  $region13: #{bilstm_model_forward.1} parent=0 // pred_fallthru
    _
  // Predicated region
  $region14: #{bilstm_model_forward.1} parent=0 // pred_check
    _
  $region15: #{bilstm_model_forward.1} parent=0 // pred_check_branch
    %30 = sbr.rel (0) target = $region17
  $region16: #{bilstm_model_forward.1} parent=0 // pred_region
    _
  $region17: #{bilstm_model_forward.1} parent=0 // pred_fallthru
    _
  // Predicated region
  $region18: #{bilstm_model_forward.1} parent=0 // pred_check
    _
  $region19: #{bilstm_model_forward.1} parent=0 // pred_check_branch
    %32 = sbr.rel (0) target = $region21
  $region20: #{bilstm_model_forward.1} parent=0 // pred_region
    _
  $region21: #{bilstm_model_forward.1} parent=0 // pred_fallthru
    _
  // Predicated region
  $region22: #{bilstm_model_forward.1} parent=0 // pred_check
    _
  $region23: #{bilstm_model_forward.1} parent=0 // pred_check_branch
    %34 = sbr.rel (0) target = $region25
  $region24: #{bilstm_model_forward.1} parent=0 // pred_region
    _
  $region25: #{bilstm_model_forward.1} parent=0 // pred_fallthru
    _
  // Predicated region
  $region26: #{bilstm_model_forward.1} parent=0 // pred_check
    _
  $region27: #{bilstm_model_forward.1} parent=0 // pred_check_branch
    %36 = sbr.rel (0) target = $region29
  $region28: #{bilstm_model_forward.1} parent=0 // pred_region
    _
  $region29: #{bilstm_model_forward.1} parent=0 // pred_fallthru
    _
  // Predicated region
  $region30: #{bilstm_model_forward.1} parent=0 // pred_check
    _
  $region31: #{bilstm_model_forward.1} parent=0 // pred_check_branch
    %38 = sbr.rel (0) target = $region33
  $region32: #{bilstm_model_forward.1} parent=0 // pred_region
    _
  $region33: #{bilstm_model_forward.1} parent=0 // pred_fallthru
    _
  // Predicated region
  $region34: #{bilstm_model_forward.1} parent=0 // pred_check
    _
  $region35: #{bilstm_model_forward.1} parent=0 // pred_check_branch
    %40 = sbr.rel (0) target = $region37
  $region36: #{bilstm_model_forward.1} parent=0 // pred_region
    _
  $region37: #{bilstm_model_forward.1} parent=0 // pred_fallthru
    _
  // Predicated region
  $region38: #{bilstm_model_forward.1} parent=0 // pred_check
    _
  $region39: #{bilstm_model_forward.1} parent=0 // pred_check_branch
    %42 = sbr.rel (0) target = $region41
  $region40: #{bilstm_model_forward.1} parent=0 // pred_region
    _
  $region41: #{bilstm_model_forward.1} parent=0 // pred_fallthru
    _
  %s43 = ssub.s32 0, 0
  %s44 = smul.u32 8, %s43
  %p45 = scmp.lt.s32.totalorder %s44, 7
  %s46 = scalar_select %p45, %s44, 7
  %s47 = smul.addr %s46, 8
  %s48 = scalar_lea.vmem %s1, %s47
  %s49 = ssub.s32 0, 0
  %s50 = smul.u32 8, %s49
  %p51 = scmp.lt.s32.totalorder %s50, 7
  %s52 = scalar_select %p51, %s50, 7
  %s53 = smul.addr %s52, 8
  %s54 = scalar_lea.vmem %s1, %s53
  %s55 = ssub.s32 0, 0
  %s56 = smul.u32 8, %s55
  %p57 = scmp.eq.s32.totalorder 0, 0
  // Predicated region
  $region42: #{bilstm_model_forward.1} parent=0 // pred_check
    %p58 = pneg %p57
  $region43: #{bilstm_model_forward.1} parent=0 // pred_check_branch
    %60 = sbr.rel (%p58) target = $region45
  $region44: #{bilstm_model_forward.1} parent=0 // pred_region
    %vm61 = vcmask 261120
    %62 = vst.msk [vmem:[#allocation4] sm:$0xff] %vm61, 0.0
    %63 = vst.msk [vmem:[#allocation5] sm:$0xff] %vm61, 0.0
    %64 = vst.msk [vmem:[#allocation6] sm:$0xff] %vm61, 0.0
    %65 = vst.msk [vmem:[#allocation7] sm:$0xff] %vm61, 0.0
  $region45: #{bilstm_model_forward.1} parent=0 // pred_fallthru
    _
  %v66 = vld [vmem:[%s0] sm:$0xff]
  %v67 = vld [vmem:[%s0 + $0x8] sm:$0xff]
  %v68 = vld [vmem:[%s0 + $0x10] sm:$0xff]
  %v69 = vld [vmem:[%s0 + $0x18] sm:$0xff]
  %v70 = vld [vmem:[%s0 + $0x20] sm:$0xff]
  %v71 = vld [vmem:[%s0 + $0x28] sm:$0xff]
  %v72 = vld [vmem:[%s0 + $0x30] sm:$0xff]
  %v73 = vld [vmem:[%s0 + $0x38] sm:$0xff]
  %v74 = vld [vmem:[%s54] sm:$0xff]
  %v75 = vld [vmem:[%s54 + $0x8] sm:$0xff]
  %v76 = vld [vmem:[%s54 + $0x10] sm:$0xff]
  %v77 = vld [vmem:[%s54 + $0x18] sm:$0xff]
  %v78 = vld [vmem:[%s54 + $0x20] sm:$0xff]
  %v79 = vld [vmem:[%s54 + $0x28] sm:$0xff]
  %v80 = vld [vmem:[%s54 + $0x30] sm:$0xff]
  %v81 = vld [vmem:[%s54 + $0x38] sm:$0xff]
  %v82 = vld [vmem:[%s2] sm:$0xff]
  %v83 = vld [vmem:[%s2 + $0x8] sm:$0xff]
  %v84 = vld [vmem:[%s4] sm:$0x1]
  %v86 = vlaneseq
  %v87 = vshrl.u32 %v86, 7
  %v88 = vsub.s32 0, %v87
  %v89 = vrot.slane %v84, %v88
  %vm91 = vcmask 130048
  %v93 = vsel %vm91, %v66, 0
  %v96 = vsel %vm91, %v67, 0
  %v99 = vsel %vm91, %v68, 0
  %v102 = vsel %vm91, %v69, 0
  %v105 = vsel %vm91, %v70, 0
  %v108 = vsel %vm91, %v71, 0
  %v111 = vsel %vm91, %v72, 0
  %v114 = vsel %vm91, %v73, 0
  %116 = vmatprep.subr.mxu0 0.0
  %117 = vmatpush1.msra.mxu0 0.0
  %118 = vmatprep.subr.mxu0 0.0
  %119 = vmatpush1.msra.mxu0 0.0
  %120 = vmatprep.subr.mxu0 0.0
  %121 = vmatpush1.msra.mxu0 0.0
  %122 = vmatprep.subr.mxu0 0.0
  %123 = vmatpush1.msra.mxu0 0.0
  %124 = vmatprep.subr.mxu0 0.0
  %125 = vmatpush1.msra.mxu0 0.0
  %126 = vmatprep.subr.mxu0 0.0
  %127 = vmatpush1.msra.mxu0 0.0
  %128 = vmatprep.subr.mxu0 0.0
  %129 = vmatpush1.msra.mxu0 0.0
  %130 = vmatprep.subr.mxu0 0.0
  %131 = vmatpush1.msra.mxu0 0.0
  %132 = vmatprep.subr.mxu0 0.0
  %133 = vmatpush1.msra.mxu0 0.0
  %134 = vmatprep.subr.mxu0 0.0
  %135 = vmatpush1.msra.mxu0 0.0
  %136 = vmatprep.subr.mxu0 0.0
  %137 = vmatpush1.msra.mxu0 0.0
  %138 = vmatprep.subr.mxu0 0.0
  %139 = vmatpush1.msra.mxu0 0.0
  %140 = vmatprep.subr.mxu0 0.0
  %141 = vmatpush1.msra.mxu0 0.0
  %142 = vmatprep.subr.mxu0 0.0
  %143 = vmatpush1.msra.mxu0 0.0
  %144 = vmatprep.subr.mxu0 0.0
  %145 = vmatpush1.msra.mxu0 %v83
  %146 = vmatprep.subr.mxu0 0.0
  %147 = vmatpush1.msra.mxu0 %v82
  %148 = vmatprep.subr.mxu0 0.0
  %149 = vmatpush2.msra.mxu0 0.0
  %150 = vmatprep.subr.mxu0 0.0
  %151 = vmatpush2.msra.mxu0 0.0
  %152 = vmatprep.subr.mxu0 0.0
  %153 = vmatpush2.msra.mxu0 0.0
  %154 = vmatprep.subr.mxu0 0.0
  %155 = vmatpush2.msra.mxu0 0.0
  %156 = vmatprep.subr.mxu0 0.0
  %157 = vmatpush2.msra.mxu0 0.0
  %158 = vmatprep.subr.mxu0 0.0
  %159 = vmatpush2.msra.mxu0 0.0
  %160 = vmatprep.subr.mxu0 0.0
  %161 = vmatpush2.msra.mxu0 0.0
  %162 = vmatprep.subr.mxu0 0.0
  %163 = vmatpush2.msra.mxu0 0.0
  %164 = vmatprep.subr.mxu0 0.0
  %165 = vmatpush2.msra.mxu0 0.0
  %166 = vmatprep.subr.mxu0 0.0
  %167 = vmatpush2.msra.mxu0 0.0
  %168 = vmatprep.subr.mxu0 0.0
  %169 = vmatpush2.msra.mxu0 0.0
  %170 = vmatprep.subr.mxu0 0.0
  %171 = vmatpush2.msra.mxu0 0.0
  %172 = vmatprep.subr.mxu0 0.0
  %173 = vmatpush2.msra.mxu0 0.0
  %174 = vmatprep.subr.mxu0 0.0
  %175 = vmatpush2.msra.mxu0 0.0
  %176 = vmatprep.subr.mxu0 0.0
  %177 = vmatpush2.msra.mxu0 0.0
  %178 = vmatprep.subr.mxu0 0.0
  %179 = vmatpush2.msra.mxu0 0.0
  %180 = vmatprep.mubr.f32.mxu0 0.0
  %181 = vmatmul.mubr.f32.gmra.mxu0 %v93
  %v182 = vpop.f32.mrf.mxu0
  %v183 = vadd.f32 %v89, %v182
  %v184 = vpop.f32.mrf.mxu0
  %185 = vmatprep.mubr.f32.mxu0 0.0
  %186 = vmatmul.mubr.f32.gmra.mxu0 %v96
  %v187 = vpop.f32.mrf.mxu0
  %v188 = vadd.f32 %v89, %v187
  %v189 = vpop.f32.mrf.mxu0
  %190 = vmatprep.mubr.f32.mxu0 0.0
  %191 = vmatmul.mubr.f32.gmra.mxu0 %v99
  %v192 = vpop.f32.mrf.mxu0
  %v193 = vadd.f32 %v89, %v192
  %v194 = vpop.f32.mrf.mxu0
  %195 = vmatprep.mubr.f32.mxu0 0.0
  %196 = vmatmul.mubr.f32.gmra.mxu0 %v102
  %v197 = vpop.f32.mrf.mxu0
  %v198 = vadd.f32 %v89, %v197
  %v199 = vpop.f32.mrf.mxu0
  %200 = vmatprep.mubr.f32.mxu0 0.0
  %201 = vmatmul.mubr.f32.gmra.mxu0 %v105
  %v202 = vpop.f32.mrf.mxu0
  %v203 = vadd.f32 %v89, %v202
  %v204 = vpop.f32.mrf.mxu0
  %205 = vmatprep.mubr.f32.mxu0 0.0
  %206 = vmatmul.mubr.f32.gmra.mxu0 %v108
  %v207 = vpop.f32.mrf.mxu0
  %v208 = vadd.f32 %v89, %v207
  %v209 = vpop.f32.mrf.mxu0
  %210 = vmatprep.mubr.f32.mxu0 0.0
  %211 = vmatmul.mubr.f32.gmra.mxu0 %v111
  %v212 = vpop.f32.mrf.mxu0
  %v213 = vadd.f32 %v89, %v212
  %v214 = vpop.f32.mrf.mxu0
  %215 = vmatprep.mubr.f32.mxu0 0.0
  %216 = vmatmul.mubr.f32.gmra.mxu0 %v114
  %v217 = vpop.f32.mrf.mxu0
  %v218 = vadd.f32 %v89, %v217
  %v219 = vpop.f32.mrf.mxu0
  %220 = vdwg.mxu0
  %v221 = vld [vmem:[%s3] sm:$0xff]
  %v222 = vld [vmem:[%s3 + $0x8] sm:$0xff]
  %v223 = vld [vmem:[%s5] sm:$0x1]
  %v225 = vlaneseq
  %v226 = vshrl.u32 %v225, 7
  %v227 = vsub.s32 0, %v226
  %v228 = vrot.slane %v223, %v227
  %v231 = vsel %vm91, %v74, 0
  %v234 = vsel %vm91, %v75, 0
  %v237 = vsel %vm91, %v76, 0
  %v240 = vsel %vm91, %v77, 0
  %v243 = vsel %vm91, %v78, 0
  %v246 = vsel %vm91, %v79, 0
  %v249 = vsel %vm91, %v80, 0
  %v252 = vsel %vm91, %v81, 0
  %254 = vmatprep.subr.mxu0 0.0
  %255 = vmatpush1.msra.mxu0 0.0
  %256 = vmatprep.subr.mxu0 0.0
  %257 = vmatpush1.msra.mxu0 0.0
  %258 = vmatprep.subr.mxu0 0.0
  %259 = vmatpush1.msra.mxu0 0.0
  %260 = vmatprep.subr.mxu0 0.0
  %261 = vmatpush1.msra.mxu0 0.0
  %262 = vmatprep.subr.mxu0 0.0
  %263 = vmatpush1.msra.mxu0 0.0
  %264 = vmatprep.subr.mxu0 0.0
  %265 = vmatpush1.msra.mxu0 0.0
  %266 = vmatprep.subr.mxu0 0.0
  %267 = vmatpush1.msra.mxu0 0.0
  %268 = vmatprep.subr.mxu0 0.0
  %269 = vmatpush1.msra.mxu0 0.0
  %270 = vmatprep.subr.mxu0 0.0
  %271 = vmatpush1.msra.mxu0 0.0
  %272 = vmatprep.subr.mxu0 0.0
  %273 = vmatpush1.msra.mxu0 0.0
  %274 = vmatprep.subr.mxu0 0.0
  %275 = vmatpush1.msra.mxu0 0.0
  %276 = vmatprep.subr.mxu0 0.0
  %277 = vmatpush1.msra.mxu0 0.0
  %278 = vmatprep.subr.mxu0 0.0
  %279 = vmatpush1.msra.mxu0 0.0
  %280 = vmatprep.subr.mxu0 0.0
  %281 = vmatpush1.msra.mxu0 0.0
  %282 = vmatprep.subr.mxu0 0.0
  %283 = vmatpush1.msra.mxu0 %v222
  %284 = vmatprep.subr.mxu0 0.0
  %285 = vmatpush1.msra.mxu0 %v221
  %286 = vmatprep.subr.mxu0 0.0
  %287 = vmatpush2.msra.mxu0 0.0
  %288 = vmatprep.subr.mxu0 0.0
  %289 = vmatpush2.msra.mxu0 0.0
  %290 = vmatprep.subr.mxu0 0.0
  %291 = vmatpush2.msra.mxu0 0.0
  %292 = vmatprep.subr.mxu0 0.0
  %293 = vmatpush2.msra.mxu0 0.0
  %294 = vmatprep.subr.mxu0 0.0
  %295 = vmatpush2.msra.mxu0 0.0
  %296 = vmatprep.subr.mxu0 0.0
  %297 = vmatpush2.msra.mxu0 0.0
  %298 = vmatprep.subr.mxu0 0.0
  %299 = vmatpush2.msra.mxu0 0.0
  %300 = vmatprep.subr.mxu0 0.0
  %301 = vmatpush2.msra.mxu0 0.0
  %302 = vmatprep.subr.mxu0 0.0
  %303 = vmatpush2.msra.mxu0 0.0
  %304 = vmatprep.subr.mxu0 0.0
  %305 = vmatpush2.msra.mxu0 0.0
  %306 = vmatprep.subr.mxu0 0.0
  %307 = vmatpush2.msra.mxu0 0.0
  %308 = vmatprep.subr.mxu0 0.0
  %309 = vmatpush2.msra.mxu0 0.0
  %310 = vmatprep.subr.mxu0 0.0
  %311 = vmatpush2.msra.mxu0 0.0
  %312 = vmatprep.subr.mxu0 0.0
  %313 = vmatpush2.msra.mxu0 0.0
  %314 = vmatprep.subr.mxu0 0.0
  %315 = vmatpush2.msra.mxu0 0.0
  %316 = vmatprep.subr.mxu0 0.0
  %317 = vmatpush2.msra.mxu0 0.0
  %318 = vmatprep.mubr.f32.mxu0 0.0
  %319 = vmatmul.mubr.f32.gmra.mxu0 %v231
  %v320 = vpop.f32.mrf.mxu0
  %v321 = vadd.f32 %v228, %v320
  %v322 = vpop.f32.mrf.mxu0
  %323 = vmatprep.mubr.f32.mxu0 0.0
  %324 = vmatmul.mubr.f32.gmra.mxu0 %v234
  %v325 = vpop.f32.mrf.mxu0
  %v326 = vadd.f32 %v228, %v325
  %v327 = vpop.f32.mrf.mxu0
  %328 = vmatprep.mubr.f32.mxu0 0.0
  %329 = vmatmul.mubr.f32.gmra.mxu0 %v237
  %v330 = vpop.f32.mrf.mxu0
  %v331 = vadd.f32 %v228, %v330
  %v332 = vpop.f32.mrf.mxu0
  %333 = vmatprep.mubr.f32.mxu0 0.0
  %334 = vmatmul.mubr.f32.gmra.mxu0 %v240
  %v335 = vpop.f32.mrf.mxu0
  %v336 = vadd.f32 %v228, %v335
  %v337 = vpop.f32.mrf.mxu0
  %338 = vmatprep.mubr.f32.mxu0 0.0
  %339 = vmatmul.mubr.f32.gmra.mxu0 %v243
  %v340 = vpop.f32.mrf.mxu0
  %v341 = vadd.f32 %v228, %v340
  %v342 = vpop.f32.mrf.mxu0
  %343 = vmatprep.mubr.f32.mxu0 0.0
  %344 = vmatmul.mubr.f32.gmra.mxu0 %v246
  %v345 = vpop.f32.mrf.mxu0
  %v346 = vadd.f32 %v228, %v345
  %v347 = vpop.f32.mrf.mxu0
  %348 = vmatprep.mubr.f32.mxu0 0.0
  %349 = vmatmul.mubr.f32.gmra.mxu0 %v249
  %v350 = vpop.f32.mrf.mxu0
  %v351 = vadd.f32 %v228, %v350
  %v352 = vpop.f32.mrf.mxu0
  %353 = vmatprep.mubr.f32.mxu0 0.0
  %354 = vmatmul.mubr.f32.gmra.mxu0 %v252
  %v355 = vpop.f32.mrf.mxu0
  %v356 = vadd.f32 %v228, %v355
  %v357 = vpop.f32.mrf.mxu0
  %358 = vdwg.mxu0
  %359 = vst [vmem:[#allocation2] sm:$0xff] %v183
  %360 = vst [vmem:[#allocation2 + $0x8] sm:$0xff] %v188
  %361 = vst [vmem:[#allocation2 + $0x10] sm:$0xff] %v193
  %362 = vst [vmem:[#allocation2 + $0x18] sm:$0xff] %v198
  %363 = vst [vmem:[#allocation2 + $0x20] sm:$0xff] %v203
  %364 = vst [vmem:[#allocation2 + $0x28] sm:$0xff] %v208
  %365 = vst [vmem:[#allocation2 + $0x30] sm:$0xff] %v213
  %366 = vst [vmem:[#allocation2 + $0x38] sm:$0xff] %v218
  %367 = vst [vmem:[#allocation3] sm:$0xff] %v321
  %368 = vst [vmem:[#allocation3 + $0x8] sm:$0xff] %v326
  %369 = vst [vmem:[#allocation3 + $0x10] sm:$0xff] %v331
  %370 = vst [vmem:[#allocation3 + $0x18] sm:$0xff] %v336
  %371 = vst [vmem:[#allocation3 + $0x20] sm:$0xff] %v341
  %372 = vst [vmem:[#allocation3 + $0x28] sm:$0xff] %v346
  %373 = vst [vmem:[#allocation3 + $0x30] sm:$0xff] %v351
  %374 = vst [vmem:[#allocation3 + $0x38] sm:$0xff] %v356
  %v375 = vld [vmem:[%s6] sm:$0xff]
  %v376 = vld [vmem:[%s6 + $0x8] sm:$0xff]
  %v377 = vld [vmem:[%s6 + $0x10] sm:$0xff]
  %v378 = vld [vmem:[%s6 + $0x18] sm:$0xff]
  %v379 = vld [vmem:[%s6 + $0x20] sm:$0xff]
  %v380 = vld [vmem:[%s6 + $0x28] sm:$0xff]
  %v381 = vld [vmem:[%s6 + $0x30] sm:$0xff]
  %v382 = vld [vmem:[%s6 + $0x38] sm:$0xff]
  %v383 = vld [vmem:[%s6 + $0x40] sm:$0xff]
  %v384 = vld [vmem:[%s6 + $0x48] sm:$0xff]
  %v385 = vld [vmem:[%s6 + $0x50] sm:$0xff]
  %v386 = vld [vmem:[%s6 + $0x58] sm:$0xff]
  %v387 = vld [vmem:[%s6 + $0x60] sm:$0xff]
  %v388 = vld [vmem:[%s6 + $0x68] sm:$0xff]
  %v389 = vld [vmem:[%s6 + $0x70] sm:$0xff]
  %v390 = vld [vmem:[%s6 + $0x78] sm:$0xff]
  %v391 = vld [vmem:[#allocation4] sm:$0xff]
  %v392 = vld [vmem:[#allocation5] sm:$0xff]
  %v393 = vld [vmem:[#allocation6] sm:$0xff]
  %v394 = vld [vmem:[#allocation7] sm:$0xff]
  %396 = vrot.lane.b32.xlu0 %v393, 32
  %v397 = vpop.permute.xlu0 %396
  %vm399 = vcmask 261120
  %v400 = vsel %vm399, %v391, %v397
  %vm401 = vcmask 523264
  %v403 = vsel %vm401, %v400, 0
  %405 = vmatprep.subr.mxu0 0.0
  %406 = vmatpush1.msra.mxu0 0.0
  %407 = vmatprep.subr.mxu0 0.0
  %408 = vmatpush1.msra.mxu0 0.0
  %409 = vmatprep.subr.mxu0 0.0
  %410 = vmatpush1.msra.mxu0 0.0
  %411 = vmatprep.subr.mxu0 0.0
  %412 = vmatpush1.msra.mxu0 0.0
  %413 = vmatprep.subr.mxu0 0.0
  %414 = vmatpush1.msra.mxu0 0.0
  %415 = vmatprep.subr.mxu0 0.0
  %416 = vmatpush1.msra.mxu0 0.0
  %417 = vmatprep.subr.mxu0 0.0
  %418 = vmatpush1.msra.mxu0 0.0
  %419 = vmatprep.subr.mxu0 0.0
  %420 = vmatpush1.msra.mxu0 0.0
  %421 = vmatprep.subr.mxu0 %v390
  %422 = vmatpush1.msra.mxu0 %v389
  %423 = vmatprep.subr.mxu0 %v388
  %424 = vmatpush1.msra.mxu0 %v387
  %425 = vmatprep.subr.mxu0 %v386
  %426 = vmatpush1.msra.mxu0 %v385
  %427 = vmatprep.subr.mxu0 %v384
  %428 = vmatpush1.msra.mxu0 %v383
  %429 = vmatprep.subr.mxu0 %v382
  %430 = vmatpush1.msra.mxu0 %v381
  %431 = vmatprep.subr.mxu0 %v380
  %432 = vmatpush1.msra.mxu0 %v379
  %433 = vmatprep.subr.mxu0 %v378
  %434 = vmatpush1.msra.mxu0 %v377
  %435 = vmatprep.subr.mxu0 %v376
  %436 = vmatpush1.msra.mxu0 %v375
  %437 = vmatprep.subr.mxu0 0.0
  %438 = vmatpush2.msra.mxu0 0.0
  %439 = vmatprep.subr.mxu0 0.0
  %440 = vmatpush2.msra.mxu0 0.0
  %441 = vmatprep.subr.mxu0 0.0
  %442 = vmatpush2.msra.mxu0 0.0
  %443 = vmatprep.subr.mxu0 0.0
  %444 = vmatpush2.msra.mxu0 0.0
  %445 = vmatprep.subr.mxu0 0.0
  %446 = vmatpush2.msra.mxu0 0.0
  %447 = vmatprep.subr.mxu0 0.0
  %448 = vmatpush2.msra.mxu0 0.0
  %449 = vmatprep.subr.mxu0 0.0
  %450 = vmatpush2.msra.mxu0 0.0
  %451 = vmatprep.subr.mxu0 0.0
  %452 = vmatpush2.msra.mxu0 0.0
  %453 = vmatprep.subr.mxu0 0.0
  %454 = vmatpush2.msra.mxu0 0.0
  %455 = vmatprep.subr.mxu0 0.0
  %456 = vmatpush2.msra.mxu0 0.0
  %457 = vmatprep.subr.mxu0 0.0
  %458 = vmatpush2.msra.mxu0 0.0
  %459 = vmatprep.subr.mxu0 0.0
  %460 = vmatpush2.msra.mxu0 0.0
  %461 = vmatprep.subr.mxu0 0.0
  %462 = vmatpush2.msra.mxu0 0.0
  %463 = vmatprep.subr.mxu0 0.0
  %464 = vmatpush2.msra.mxu0 0.0
  %465 = vmatprep.subr.mxu0 0.0
  %466 = vmatpush2.msra.mxu0 0.0
  %467 = vmatprep.subr.mxu0 0.0
  %468 = vmatpush2.msra.mxu0 0.0
  %469 = vmatprep.mubr.f32.mxu0 0.0
  %470 = vmatmul.mubr.f32.gmra.mxu0 %v403
  %v471 = vpop.f32.mrf.mxu0
  %v472 = vadd.f32 0.0, %v471
  %v473 = vpop.f32.mrf.mxu0
  %v474 = vadd.f32 0.0, %v473
  %475 = vdwg.mxu0
  %v476 = vld [vmem:[#allocation2] sm:$0xff]
  %v477 = vadd.f32 %v476, %v472
  %s478 = scalar_lea.vmem [#allocation3], 56
  %v479 = vld [vmem:[%s478] sm:$0xff]
  %v480 = vadd.f32 %v479, %v474
  %v481 = vxor.u32 %v477, 2147483648
  %v482 = vmul.f32 %v481, 1.442695
  %v483 = vpow.pop %v482
  %v484 = vadd.f32 %v483, 1.0
  %v485 = vrcp.pop %v484
  %v486 = vmul.f32 1.0, %v485
  %v487 = vtanh.pop %v477
  %489 = vrot.lane.b32.xlu0 %v392, 32
  %v490 = vpop.permute.xlu0 %489
  %v492 = vmul.f32 %v486, %v490
  %494 = vrot.lane.b32.xlu0 %v487, 32
  %v495 = vpop.permute.xlu0 %494
  %v497 = vmul.f32 %v486, %v495
  %499 = vrot.lane.b32.xlu0 %v497, 32
  %v500 = vpop.permute.xlu0 %499
  %v502 = vadd.f32 %v492, %v500
  %v503 = vtanh.pop %v502
  %505 = vrot.lane.b32.xlu0 %v503, 32
  %v506 = vpop.permute.xlu0 %505
  %v508 = vmul.f32 %v486, %v506
  %v509 = vxor.u32 %v480, 2147483648
  %v510 = vmul.f32 %v509, 1.442695
  %v511 = vpow.pop %v510
  %v512 = vadd.f32 %v511, 1.0
  %v513 = vrcp.pop %v512
  %v514 = vmul.f32 1.0, %v513
  %v515 = vtanh.pop %v480
  %517 = vrot.lane.b32.xlu0 %v394, 32
  %v518 = vpop.permute.xlu0 %517
  %v520 = vmul.f32 %v514, %v518
  %522 = vrot.lane.b32.xlu0 %v515, 32
  %v523 = vpop.permute.xlu0 %522
  %v525 = vmul.f32 %v514, %v523
  %527 = vrot.lane.b32.xlu0 %v525, 32
  %v528 = vpop.permute.xlu0 %527
  %v530 = vadd.f32 %v520, %v528
  %v531 = vtanh.pop %v530
  %533 = vrot.lane.b32.xlu0 %v531, 32
  %v534 = vpop.permute.xlu0 %533
  %v536 = vmul.f32 %v514, %v534
  %538 = vrot.lane.b32.xlu0 %v508, 64
  %v539 = vpop.permute.xlu0 %538
  %542 = vrot.lane.b32.xlu0 %v536, 96
  %v543 = vpop.permute.xlu0 %542
  %v545 = vsel %vm399, %v539, %v543
  %v547 = vsel %vm401, %v545, 0
  %549 = vmatprep.subr.mxu0 0.0
  %550 = vmatpush1.msra.mxu0 0.0
  %551 = vmatprep.subr.mxu0 0.0
  %552 = vmatpush1.msra.mxu0 0.0
  %553 = vmatprep.subr.mxu0 0.0
  %554 = vmatpush1.msra.mxu0 0.0
  %555 = vmatprep.subr.mxu0 0.0
  %556 = vmatpush1.msra.mxu0 0.0
  %557 = vmatprep.subr.mxu0 0.0
  %558 = vmatpush1.msra.mxu0 0.0
  %559 = vmatprep.subr.mxu0 0.0
  %560 = vmatpush1.msra.mxu0 0.0
  %561 = vmatprep.subr.mxu0 0.0
  %562 = vmatpush1.msra.mxu0 0.0
  %563 = vmatprep.subr.mxu0 0.0
  %564 = vmatpush1.msra.mxu0 0.0
  %565 = vmatprep.subr.mxu0 %v390
  %566 = vmatpush1.msra.mxu0 %v389
  %567 = vmatprep.subr.mxu0 %v388
  %568 = vmatpush1.msra.mxu0 %v387
  %569 = vmatprep.subr.mxu0 %v386
  %570 = vmatpush1.msra.mxu0 %v385
  %571 = vmatprep.subr.mxu0 %v384
  %572 = vmatpush1.msra.mxu0 %v383
  %573 = vmatprep.subr.mxu0 %v382
  %574 = vmatpush1.msra.mxu0 %v381
  %575 = vmatprep.subr.mxu0 %v380
  %576 = vmatpush1.msra.mxu0 %v379
  %577 = vmatprep.subr.mxu0 %v378
  %578 = vmatpush1.msra.mxu0 %v377
  %579 = vmatprep.subr.mxu0 %v376
  %580 = vmatpush1.msra.mxu0 %v375
  %581 = vmatprep.subr.mxu0 0.0
  %582 = vmatpush2.msra.mxu0 0.0
  %583 = vmatprep.subr.mxu0 0.0
  %584 = vmatpush2.msra.mxu0 0.0
  %585 = vmatprep.subr.mxu0 0.0
  %586 = vmatpush2.msra.mxu0 0.0
  %587 = vmatprep.subr.mxu0 0.0
  %588 = vmatpush2.msra.mxu0 0.0
  %589 = vmatprep.subr.mxu0 0.0
  %590 = vmatpush2.msra.mxu0 0.0
  %591 = vmatprep.subr.mxu0 0.0
  %592 = vmatpush2.msra.mxu0 0.0
  %593 = vmatprep.subr.mxu0 0.0
  %594 = vmatpush2.msra.mxu0 0.0
  %595 = vmatprep.subr.mxu0 0.0
  %596 = vmatpush2.msra.mxu0 0.0
  %597 = vmatprep.subr.mxu0 0.0
  %598 = vmatpush2.msra.mxu0 0.0
  %599 = vmatprep.subr.mxu0 0.0
  %600 = vmatpush2.msra.mxu0 0.0
  %601 = vmatprep.subr.mxu0 0.0
  %602 = vmatpush2.msra.mxu0 0.0
  %603 = vmatprep.subr.mxu0 0.0
  %604 = vmatpush2.msra.mxu0 0.0
  %605 = vmatprep.subr.mxu0 0.0
  %606 = vmatpush2.msra.mxu0 0.0
  %607 = vmatprep.subr.mxu0 0.0
  %608 = vmatpush2.msra.mxu0 0.0
  %609 = vmatprep.subr.mxu0 0.0
  %610 = vmatpush2.msra.mxu0 0.0
  %611 = vmatprep.subr.mxu0 0.0
  %612 = vmatpush2.msra.mxu0 0.0
  %613 = vmatprep.mubr.f32.mxu0 0.0
  %614 = vmatmul.mubr.f32.gmra.mxu0 %v547
  %v615 = vpop.f32.mrf.mxu0
  %v616 = vadd.f32 0.0, %v615
  %v617 = vpop.f32.mrf.mxu0
  %v618 = vadd.f32 0.0, %v617
  %619 = vdwg.mxu0
  %s620 = scalar_lea.vmem [#allocation2], 8
  %v621 = vld [vmem:[%s620] sm:$0xff]
  %v622 = vadd.f32 %v621, %v616
  %s623 = scalar_lea.vmem [#allocation3], 48
  %v624 = vld [vmem:[%s623] sm:$0xff]
  %v625 = vadd.f32 %v624, %v618
  %v626 = vxor.u32 %v622, 2147483648
  %v627 = vmul.f32 %v626, 1.442695
  %v628 = vpow.pop %v627
  %v629 = vadd.f32 %v628, 1.0
  %v630 = vrcp.pop %v629
  %v631 = vmul.f32 1.0, %v630
  %v632 = vtanh.pop %v622
  %v633 = vmul.f32 %v631, %v502
  %635 = vrot.lane.b32.xlu0 %v632, 32
  %v636 = vpop.permute.xlu0 %635
  %v638 = vmul.f32 %v631, %v636
  %640 = vrot.lane.b32.xlu0 %v638, 32
  %v641 = vpop.permute.xlu0 %640
  %v643 = vadd.f32 %v633, %v641
  %v644 = vtanh.pop %v643
  %646 = vrot.lane.b32.xlu0 %v644, 32
  %v647 = vpop.permute.xlu0 %646
  %v649 = vmul.f32 %v631, %v647
  %v650 = vxor.u32 %v625, 2147483648
  %v651 = vmul.f32 %v650, 1.442695
  %v652 = vpow.pop %v651
  %v653 = vadd.f32 %v652, 1.0
  %v654 = vrcp.pop %v653
  %v655 = vmul.f32 1.0, %v654
  %v656 = vtanh.pop %v625
  %v657 = vmul.f32 %v655, %v530
  %659 = vrot.lane.b32.xlu0 %v656, 32
  %v660 = vpop.permute.xlu0 %659
  %v662 = vmul.f32 %v655, %v660
  %664 = vrot.lane.b32.xlu0 %v662, 32
  %v665 = vpop.permute.xlu0 %664
  %v667 = vadd.f32 %v657, %v665
  %v668 = vtanh.pop %v667
  %670 = vrot.lane.b32.xlu0 %v668, 32
  %v671 = vpop.permute.xlu0 %670
  %v673 = vmul.f32 %v655, %v671
  %675 = vrot.lane.b32.xlu0 %v649, 64
  %v676 = vpop.permute.xlu0 %675
  %679 = vrot.lane.b32.xlu0 %v673, 96
  %v680 = vpop.permute.xlu0 %679
  %v682 = vsel %vm399, %v676, %v680
  %v684 = vsel %vm401, %v682, 0
  %686 = vmatprep.subr.mxu0 0.0
  %687 = vmatpush1.msra.mxu0 0.0
  %688 = vmatprep.subr.mxu0 0.0
  %689 = vmatpush1.msra.mxu0 0.0
  %690 = vmatprep.subr.mxu0 0.0
  %691 = vmatpush1.msra.mxu0 0.0
  %692 = vmatprep.subr.mxu0 0.0
  %693 = vmatpush1.msra.mxu0 0.0
  %694 = vmatprep.subr.mxu0 0.0
  %695 = vmatpush1.msra.mxu0 0.0
  %696 = vmatprep.subr.mxu0 0.0
  %697 = vmatpush1.msra.mxu0 0.0
  %698 = vmatprep.subr.mxu0 0.0
  %699 = vmatpush1.msra.mxu0 0.0
  %700 = vmatprep.subr.mxu0 0.0
  %701 = vmatpush1.msra.mxu0 0.0
  %702 = vmatprep.subr.mxu0 %v390
  %703 = vmatpush1.msra.mxu0 %v389
  %704 = vmatprep.subr.mxu0 %v388
  %705 = vmatpush1.msra.mxu0 %v387
  %706 = vmatprep.subr.mxu0 %v386
  %707 = vmatpush1.msra.mxu0 %v385
  %708 = vmatprep.subr.mxu0 %v384
  %709 = vmatpush1.msra.mxu0 %v383
  %710 = vmatprep.subr.mxu0 %v382
  %711 = vmatpush1.msra.mxu0 %v381
  %712 = vmatprep.subr.mxu0 %v380
  %713 = vmatpush1.msra.mxu0 %v379
  %714 = vmatprep.subr.mxu0 %v378
  %715 = vmatpush1.msra.mxu0 %v377
  %716 = vmatprep.subr.mxu0 %v376
  %717 = vmatpush1.msra.mxu0 %v375
  %718 = vmatprep.subr.mxu0 0.0
  %719 = vmatpush2.msra.mxu0 0.0
  %720 = vmatprep.subr.mxu0 0.0
  %721 = vmatpush2.msra.mxu0 0.0
  %722 = vmatprep.subr.mxu0 0.0
  %723 = vmatpush2.msra.mxu0 0.0
  %724 = vmatprep.subr.mxu0 0.0
  %725 = vmatpush2.msra.mxu0 0.0
  %726 = vmatprep.subr.mxu0 0.0
  %727 = vmatpush2.msra.mxu0 0.0
  %728 = vmatprep.subr.mxu0 0.0
  %729 = vmatpush2.msra.mxu0 0.0
  %730 = vmatprep.subr.mxu0 0.0
  %731 = vmatpush2.msra.mxu0 0.0
  %732 = vmatprep.subr.mxu0 0.0
  %733 = vmatpush2.msra.mxu0 0.0
  %734 = vmatprep.subr.mxu0 0.0
  %735 = vmatpush2.msra.mxu0 0.0
  %736 = vmatprep.subr.mxu0 0.0
  %737 = vmatpush2.msra.mxu0 0.0
  %738 = vmatprep.subr.mxu0 0.0
  %739 = vmatpush2.msra.mxu0 0.0
  %740 = vmatprep.subr.mxu0 0.0
  %741 = vmatpush2.msra.mxu0 0.0
  %742 = vmatprep.subr.mxu0 0.0
  %743 = vmatpush2.msra.mxu0 0.0
  %744 = vmatprep.subr.mxu0 0.0
  %745 = vmatpush2.msra.mxu0 0.0
  %746 = vmatprep.subr.mxu0 0.0
  %747 = vmatpush2.msra.mxu0 0.0
  %748 = vmatprep.subr.mxu0 0.0
  %749 = vmatpush2.msra.mxu0 0.0
  %750 = vmatprep.mubr.f32.mxu0 0.0
  %751 = vmatmul.mubr.f32.gmra.mxu0 %v684
  %v752 = vpop.f32.mrf.mxu0
  %v753 = vadd.f32 0.0, %v752
  %v754 = vpop.f32.mrf.mxu0
  %v755 = vadd.f32 0.0, %v754
  %756 = vdwg.mxu0
  %s757 = scalar_lea.vmem [#allocation2], 16
  %v758 = vld [vmem:[%s757] sm:$0xff]
  %v759 = vadd.f32 %v758, %v753
  %s760 = scalar_lea.vmem [#allocation3], 40
  %v761 = vld [vmem:[%s760] sm:$0xff]
  %v762 = vadd.f32 %v761, %v755
  %v763 = vxor.u32 %v759, 2147483648
  %v764 = vmul.f32 %v763, 1.442695
  %v765 = vpow.pop %v764
  %v766 = vadd.f32 %v765, 1.0
  %v767 = vrcp.pop %v766
  %v768 = vmul.f32 1.0, %v767
  %v769 = vtanh.pop %v759
  %v770 = vmul.f32 %v768, %v643
  %772 = vrot.lane.b32.xlu0 %v769, 32
  %v773 = vpop.permute.xlu0 %772
  %v775 = vmul.f32 %v768, %v773
  %777 = vrot.lane.b32.xlu0 %v775, 32
  %v778 = vpop.permute.xlu0 %777
  %v780 = vadd.f32 %v770, %v778
  %v781 = vtanh.pop %v780
  %783 = vrot.lane.b32.xlu0 %v781, 32
  %v784 = vpop.permute.xlu0 %783
  %v786 = vmul.f32 %v768, %v784
  %v787 = vxor.u32 %v762, 2147483648
  %v788 = vmul.f32 %v787, 1.442695
  %v789 = vpow.pop %v788
  %v790 = vadd.f32 %v789, 1.0
  %v791 = vrcp.pop %v790
  %v792 = vmul.f32 1.0, %v791
  %v793 = vtanh.pop %v762
  %v794 = vmul.f32 %v792, %v667
  %796 = vrot.lane.b32.xlu0 %v793, 32
  %v797 = vpop.permute.xlu0 %796
  %v799 = vmul.f32 %v792, %v797
  %801 = vrot.lane.b32.xlu0 %v799, 32
  %v802 = vpop.permute.xlu0 %801
  %v804 = vadd.f32 %v794, %v802
  %v805 = vtanh.pop %v804
  %807 = vrot.lane.b32.xlu0 %v805, 32
  %v808 = vpop.permute.xlu0 %807
  %v810 = vmul.f32 %v792, %v808
  %812 = vrot.lane.b32.xlu0 %v786, 64
  %v813 = vpop.permute.xlu0 %812
  %816 = vrot.lane.b32.xlu0 %v810, 96
  %v817 = vpop.permute.xlu0 %816
  %v819 = vsel %vm399, %v813, %v817
  %v821 = vsel %vm401, %v819, 0
  %823 = vmatprep.subr.mxu0 0.0
  %824 = vmatpush1.msra.mxu0 0.0
  %825 = vmatprep.subr.mxu0 0.0
  %826 = vmatpush1.msra.mxu0 0.0
  %827 = vmatprep.subr.mxu0 0.0
  %828 = vmatpush1.msra.mxu0 0.0
  %829 = vmatprep.subr.mxu0 0.0
  %830 = vmatpush1.msra.mxu0 0.0
  %831 = vmatprep.subr.mxu0 0.0
  %832 = vmatpush1.msra.mxu0 0.0
  %833 = vmatprep.subr.mxu0 0.0
  %834 = vmatpush1.msra.mxu0 0.0
  %835 = vmatprep.subr.mxu0 0.0
  %836 = vmatpush1.msra.mxu0 0.0
  %837 = vmatprep.subr.mxu0 0.0
  %838 = vmatpush1.msra.mxu0 0.0
  %839 = vmatprep.subr.mxu0 %v390
  %840 = vmatpush1.msra.mxu0 %v389
  %841 = vmatprep.subr.mxu0 %v388
  %842 = vmatpush1.msra.mxu0 %v387
  %843 = vmatprep.subr.mxu0 %v386
  %844 = vmatpush1.msra.mxu0 %v385
  %845 = vmatprep.subr.mxu0 %v384
  %846 = vmatpush1.msra.mxu0 %v383
  %847 = vmatprep.subr.mxu0 %v382
  %848 = vmatpush1.msra.mxu0 %v381
  %849 = vmatprep.subr.mxu0 %v380
  %850 = vmatpush1.msra.mxu0 %v379
  %851 = vmatprep.subr.mxu0 %v378
  %852 = vmatpush1.msra.mxu0 %v377
  %853 = vmatprep.subr.mxu0 %v376
  %854 = vmatpush1.msra.mxu0 %v375
  %855 = vmatprep.subr.mxu0 0.0
  %856 = vmatpush2.msra.mxu0 0.0
  %857 = vmatprep.subr.mxu0 0.0
  %858 = vmatpush2.msra.mxu0 0.0
  %859 = vmatprep.subr.mxu0 0.0
  %860 = vmatpush2.msra.mxu0 0.0
  %861 = vmatprep.subr.mxu0 0.0
  %862 = vmatpush2.msra.mxu0 0.0
  %863 = vmatprep.subr.mxu0 0.0
  %864 = vmatpush2.msra.mxu0 0.0
  %865 = vmatprep.subr.mxu0 0.0
  %866 = vmatpush2.msra.mxu0 0.0
  %867 = vmatprep.subr.mxu0 0.0
  %868 = vmatpush2.msra.mxu0 0.0
  %869 = vmatprep.subr.mxu0 0.0
  %870 = vmatpush2.msra.mxu0 0.0
  %871 = vmatprep.subr.mxu0 0.0
  %872 = vmatpush2.msra.mxu0 0.0
  %873 = vmatprep.subr.mxu0 0.0
  %874 = vmatpush2.msra.mxu0 0.0
  %875 = vmatprep.subr.mxu0 0.0
  %876 = vmatpush2.msra.mxu0 0.0
  %877 = vmatprep.subr.mxu0 0.0
  %878 = vmatpush2.msra.mxu0 0.0
  %879 = vmatprep.subr.mxu0 0.0
  %880 = vmatpush2.msra.mxu0 0.0
  %881 = vmatprep.subr.mxu0 0.0
  %882 = vmatpush2.msra.mxu0 0.0
  %883 = vmatprep.subr.mxu0 0.0
  %884 = vmatpush2.msra.mxu0 0.0
  %885 = vmatprep.subr.mxu0 0.0
  %886 = vmatpush2.msra.mxu0 0.0
  %887 = vmatprep.mubr.f32.mxu0 0.0
  %888 = vmatmul.mubr.f32.gmra.mxu0 %v821
  %v889 = vpop.f32.mrf.mxu0
  %v890 = vadd.f32 0.0, %v889
  %v891 = vpop.f32.mrf.mxu0
  %v892 = vadd.f32 0.0, %v891
  %893 = vdwg.mxu0
  %s894 = scalar_lea.vmem [#allocation2], 24
  %v895 = vld [vmem:[%s894] sm:$0xff]
  %v896 = vadd.f32 %v895, %v890
  %s897 = scalar_lea.vmem [#allocation3], 32
  %v898 = vld [vmem:[%s897] sm:$0xff]
  %v899 = vadd.f32 %v898, %v892
  %v900 = vxor.u32 %v896, 2147483648
  %v901 = vmul.f32 %v900, 1.442695
  %v902 = vpow.pop %v901
  %v903 = vadd.f32 %v902, 1.0
  %v904 = vrcp.pop %v903
  %v905 = vmul.f32 1.0, %v904
  %v906 = vtanh.pop %v896
  %v907 = vmul.f32 %v905, %v780
  %909 = vrot.lane.b32.xlu0 %v906, 32
  %v910 = vpop.permute.xlu0 %909
  %v912 = vmul.f32 %v905, %v910
  %914 = vrot.lane.b32.xlu0 %v912, 32
  %v915 = vpop.permute.xlu0 %914
  %v917 = vadd.f32 %v907, %v915
  %v918 = vtanh.pop %v917
  %920 = vrot.lane.b32.xlu0 %v918, 32
  %v921 = vpop.permute.xlu0 %920
  %v923 = vmul.f32 %v905, %v921
  %v924 = vxor.u32 %v899, 2147483648
  %v925 = vmul.f32 %v924, 1.442695
  %v926 = vpow.pop %v925
  %v927 = vadd.f32 %v926, 1.0
  %v928 = vrcp.pop %v927
  %v929 = vmul.f32 1.0, %v928
  %v930 = vtanh.pop %v899
  %v931 = vmul.f32 %v929, %v804
  %933 = vrot.lane.b32.xlu0 %v930, 32
  %v934 = vpop.permute.xlu0 %933
  %v936 = vmul.f32 %v929, %v934
  %938 = vrot.lane.b32.xlu0 %v936, 32
  %v939 = vpop.permute.xlu0 %938
  %v941 = vadd.f32 %v931, %v939
  %v942 = vtanh.pop %v941
  %944 = vrot.lane.b32.xlu0 %v942, 32
  %v945 = vpop.permute.xlu0 %944
  %v947 = vmul.f32 %v929, %v945
  %949 = vrot.lane.b32.xlu0 %v923, 64
  %v950 = vpop.permute.xlu0 %949
  %953 = vrot.lane.b32.xlu0 %v947, 96
  %v954 = vpop.permute.xlu0 %953
  %v956 = vsel %vm399, %v950, %v954
  %v958 = vsel %vm401, %v956, 0
  %960 = vmatprep.subr.mxu0 0.0
  %961 = vmatpush1.msra.mxu0 0.0
  %962 = vmatprep.subr.mxu0 0.0
  %963 = vmatpush1.msra.mxu0 0.0
  %964 = vmatprep.subr.mxu0 0.0
  %965 = vmatpush1.msra.mxu0 0.0
  %966 = vmatprep.subr.mxu0 0.0
  %967 = vmatpush1.msra.mxu0 0.0
  %968 = vmatprep.subr.mxu0 0.0
  %969 = vmatpush1.msra.mxu0 0.0
  %970 = vmatprep.subr.mxu0 0.0
  %971 = vmatpush1.msra.mxu0 0.0
  %972 = vmatprep.subr.mxu0 0.0
  %973 = vmatpush1.msra.mxu0 0.0
  %974 = vmatprep.subr.mxu0 0.0
  %975 = vmatpush1.msra.mxu0 0.0
  %976 = vmatprep.subr.mxu0 %v390
  %977 = vmatpush1.msra.mxu0 %v389
  %978 = vmatprep.subr.mxu0 %v388
  %979 = vmatpush1.msra.mxu0 %v387
  %980 = vmatprep.subr.mxu0 %v386
  %981 = vmatpush1.msra.mxu0 %v385
  %982 = vmatprep.subr.mxu0 %v384
  %983 = vmatpush1.msra.mxu0 %v383
  %984 = vmatprep.subr.mxu0 %v382
  %985 = vmatpush1.msra.mxu0 %v381
  %986 = vmatprep.subr.mxu0 %v380
  %987 = vmatpush1.msra.mxu0 %v379
  %988 = vmatprep.subr.mxu0 %v378
  %989 = vmatpush1.msra.mxu0 %v377
  %990 = vmatprep.subr.mxu0 %v376
  %991 = vmatpush1.msra.mxu0 %v375
  %992 = vmatprep.subr.mxu0 0.0
  %993 = vmatpush2.msra.mxu0 0.0
  %994 = vmatprep.subr.mxu0 0.0
  %995 = vmatpush2.msra.mxu0 0.0
  %996 = vmatprep.subr.mxu0 0.0
  %997 = vmatpush2.msra.mxu0 0.0
  %998 = vmatprep.subr.mxu0 0.0
  %999 = vmatpush2.msra.mxu0 0.0
  %1000 = vmatprep.subr.mxu0 0.0
  %1001 = vmatpush2.msra.mxu0 0.0
  %1002 = vmatprep.subr.mxu0 0.0
  %1003 = vmatpush2.msra.mxu0 0.0
  %1004 = vmatprep.subr.mxu0 0.0
  %1005 = vmatpush2.msra.mxu0 0.0
  %1006 = vmatprep.subr.mxu0 0.0
  %1007 = vmatpush2.msra.mxu0 0.0
  %1008 = vmatprep.subr.mxu0 0.0
  %1009 = vmatpush2.msra.mxu0 0.0
  %1010 = vmatprep.subr.mxu0 0.0
  %1011 = vmatpush2.msra.mxu0 0.0
  %1012 = vmatprep.subr.mxu0 0.0
  %1013 = vmatpush2.msra.mxu0 0.0
  %1014 = vmatprep.subr.mxu0 0.0
  %1015 = vmatpush2.msra.mxu0 0.0
  %1016 = vmatprep.subr.mxu0 0.0
  %1017 = vmatpush2.msra.mxu0 0.0
  %1018 = vmatprep.subr.mxu0 0.0
  %1019 = vmatpush2.msra.mxu0 0.0
  %1020 = vmatprep.subr.mxu0 0.0
  %1021 = vmatpush2.msra.mxu0 0.0
  %1022 = vmatprep.subr.mxu0 0.0
  %1023 = vmatpush2.msra.mxu0 0.0
  %1024 = vmatprep.mubr.f32.mxu0 0.0
  %1025 = vmatmul.mubr.f32.gmra.mxu0 %v958
  %v1026 = vpop.f32.mrf.mxu0
  %v1027 = vadd.f32 0.0, %v1026
  %v1028 = vpop.f32.mrf.mxu0
  %v1029 = vadd.f32 0.0, %v1028
  %1030 = vdwg.mxu0
  %s1031 = scalar_lea.vmem [#allocation2], 32
  %v1032 = vld [vmem:[%s1031] sm:$0xff]
  %v1033 = vadd.f32 %v1032, %v1027
  %s1034 = scalar_lea.vmem [#allocation3], 24
  %v1035 = vld [vmem:[%s1034] sm:$0xff]
  %v1036 = vadd.f32 %v1035, %v1029
  %v1037 = vxor.u32 %v1033, 2147483648
  %v1038 = vmul.f32 %v1037, 1.442695
  %v1039 = vpow.pop %v1038
  %v1040 = vadd.f32 %v1039, 1.0
  %v1041 = vrcp.pop %v1040
  %v1042 = vmul.f32 1.0, %v1041
  %v1043 = vtanh.pop %v1033
  %v1044 = vmul.f32 %v1042, %v917
  %1046 = vrot.lane.b32.xlu0 %v1043, 32
  %v1047 = vpop.permute.xlu0 %1046
  %v1049 = vmul.f32 %v1042, %v1047
  %1051 = vrot.lane.b32.xlu0 %v1049, 32
  %v1052 = vpop.permute.xlu0 %1051
  %v1054 = vadd.f32 %v1044, %v1052
  %v1055 = vtanh.pop %v1054
  %1057 = vrot.lane.b32.xlu0 %v1055, 32
  %v1058 = vpop.permute.xlu0 %1057
  %v1060 = vmul.f32 %v1042, %v1058
  %v1061 = vxor.u32 %v1036, 2147483648
  %v1062 = vmul.f32 %v1061, 1.442695
  %v1063 = vpow.pop %v1062
  %v1064 = vadd.f32 %v1063, 1.0
  %v1065 = vrcp.pop %v1064
  %v1066 = vmul.f32 1.0, %v1065
  %v1067 = vtanh.pop %v1036
  %v1068 = vmul.f32 %v1066, %v941
  %1070 = vrot.lane.b32.xlu0 %v1067, 32
  %v1071 = vpop.permute.xlu0 %1070
  %v1073 = vmul.f32 %v1066, %v1071
  %1075 = vrot.lane.b32.xlu0 %v1073, 32
  %v1076 = vpop.permute.xlu0 %1075
  %v1078 = vadd.f32 %v1068, %v1076
  %v1079 = vtanh.pop %v1078
  %1081 = vrot.lane.b32.xlu0 %v1079, 32
  %v1082 = vpop.permute.xlu0 %1081
  %v1084 = vmul.f32 %v1066, %v1082
  %1086 = vrot.lane.b32.xlu0 %v1060, 64
  %v1087 = vpop.permute.xlu0 %1086
  %1090 = vrot.lane.b32.xlu0 %v1084, 96
  %v1091 = vpop.permute.xlu0 %1090
  %v1093 = vsel %vm399, %v1087, %v1091
  %v1095 = vsel %vm401, %v1093, 0
  %1097 = vmatprep.subr.mxu0 0.0
  %1098 = vmatpush1.msra.mxu0 0.0
  %1099 = vmatprep.subr.mxu0 0.0
  %1100 = vmatpush1.msra.mxu0 0.0
  %1101 = vmatprep.subr.mxu0 0.0
  %1102 = vmatpush1.msra.mxu0 0.0
  %1103 = vmatprep.subr.mxu0 0.0
  %1104 = vmatpush1.msra.mxu0 0.0
  %1105 = vmatprep.subr.mxu0 0.0
  %1106 = vmatpush1.msra.mxu0 0.0
  %1107 = vmatprep.subr.mxu0 0.0
  %1108 = vmatpush1.msra.mxu0 0.0
  %1109 = vmatprep.subr.mxu0 0.0
  %1110 = vmatpush1.msra.mxu0 0.0
  %1111 = vmatprep.subr.mxu0 0.0
  %1112 = vmatpush1.msra.mxu0 0.0
  %1113 = vmatprep.subr.mxu0 %v390
  %1114 = vmatpush1.msra.mxu0 %v389
  %1115 = vmatprep.subr.mxu0 %v388
  %1116 = vmatpush1.msra.mxu0 %v387
  %1117 = vmatprep.subr.mxu0 %v386
  %1118 = vmatpush1.msra.mxu0 %v385
  %1119 = vmatprep.subr.mxu0 %v384
  %1120 = vmatpush1.msra.mxu0 %v383
  %1121 = vmatprep.subr.mxu0 %v382
  %1122 = vmatpush1.msra.mxu0 %v381
  %1123 = vmatprep.subr.mxu0 %v380
  %1124 = vmatpush1.msra.mxu0 %v379
  %1125 = vmatprep.subr.mxu0 %v378
  %1126 = vmatpush1.msra.mxu0 %v377
  %1127 = vmatprep.subr.mxu0 %v376
  %1128 = vmatpush1.msra.mxu0 %v375
  %1129 = vmatprep.subr.mxu0 0.0
  %1130 = vmatpush2.msra.mxu0 0.0
  %1131 = vmatprep.subr.mxu0 0.0
  %1132 = vmatpush2.msra.mxu0 0.0
  %1133 = vmatprep.subr.mxu0 0.0
  %1134 = vmatpush2.msra.mxu0 0.0
  %1135 = vmatprep.subr.mxu0 0.0
  %1136 = vmatpush2.msra.mxu0 0.0
  %1137 = vmatprep.subr.mxu0 0.0
  %1138 = vmatpush2.msra.mxu0 0.0
  %1139 = vmatprep.subr.mxu0 0.0
  %1140 = vmatpush2.msra.mxu0 0.0
  %1141 = vmatprep.subr.mxu0 0.0
  %1142 = vmatpush2.msra.mxu0 0.0
  %1143 = vmatprep.subr.mxu0 0.0
  %1144 = vmatpush2.msra.mxu0 0.0
  %1145 = vmatprep.subr.mxu0 0.0
  %1146 = vmatpush2.msra.mxu0 0.0
  %1147 = vmatprep.subr.mxu0 0.0
  %1148 = vmatpush2.msra.mxu0 0.0
  %1149 = vmatprep.subr.mxu0 0.0
  %1150 = vmatpush2.msra.mxu0 0.0
  %1151 = vmatprep.subr.mxu0 0.0
  %1152 = vmatpush2.msra.mxu0 0.0
  %1153 = vmatprep.subr.mxu0 0.0
  %1154 = vmatpush2.msra.mxu0 0.0
  %1155 = vmatprep.subr.mxu0 0.0
  %1156 = vmatpush2.msra.mxu0 0.0
  %1157 = vmatprep.subr.mxu0 0.0
  %1158 = vmatpush2.msra.mxu0 0.0
  %1159 = vmatprep.subr.mxu0 0.0
  %1160 = vmatpush2.msra.mxu0 0.0
  %1161 = vmatprep.mubr.f32.mxu0 0.0
  %1162 = vmatmul.mubr.f32.gmra.mxu0 %v1095
  %v1163 = vpop.f32.mrf.mxu0
  %v1164 = vadd.f32 0.0, %v1163
  %v1165 = vpop.f32.mrf.mxu0
  %v1166 = vadd.f32 0.0, %v1165
  %1167 = vdwg.mxu0
  %s1168 = scalar_lea.vmem [#allocation2], 40
  %v1169 = vld [vmem:[%s1168] sm:$0xff]
  %v1170 = vadd.f32 %v1169, %v1164
  %s1171 = scalar_lea.vmem [#allocation3], 16
  %v1172 = vld [vmem:[%s1171] sm:$0xff]
  %v1173 = vadd.f32 %v1172, %v1166
  %v1174 = vxor.u32 %v1170, 2147483648
  %v1175 = vmul.f32 %v1174, 1.442695
  %v1176 = vpow.pop %v1175
  %v1177 = vadd.f32 %v1176, 1.0
  %v1178 = vrcp.pop %v1177
  %v1179 = vmul.f32 1.0, %v1178
  %v1180 = vtanh.pop %v1170
  %v1181 = vmul.f32 %v1179, %v1054
  %1183 = vrot.lane.b32.xlu0 %v1180, 32
  %v1184 = vpop.permute.xlu0 %1183
  %v1186 = vmul.f32 %v1179, %v1184
  %1188 = vrot.lane.b32.xlu0 %v1186, 32
  %v1189 = vpop.permute.xlu0 %1188
  %v1191 = vadd.f32 %v1181, %v1189
  %v1192 = vtanh.pop %v1191
  %1194 = vrot.lane.b32.xlu0 %v1192, 32
  %v1195 = vpop.permute.xlu0 %1194
  %v1197 = vmul.f32 %v1179, %v1195
  %v1198 = vxor.u32 %v1173, 2147483648
  %v1199 = vmul.f32 %v1198, 1.442695
  %v1200 = vpow.pop %v1199
  %v1201 = vadd.f32 %v1200, 1.0
  %v1202 = vrcp.pop %v1201
  %v1203 = vmul.f32 1.0, %v1202
  %v1204 = vtanh.pop %v1173
  %v1205 = vmul.f32 %v1203, %v1078
  %1207 = vrot.lane.b32.xlu0 %v1204, 32
  %v1208 = vpop.permute.xlu0 %1207
  %v1210 = vmul.f32 %v1203, %v1208
  %1212 = vrot.lane.b32.xlu0 %v1210, 32
  %v1213 = vpop.permute.xlu0 %1212
  %v1215 = vadd.f32 %v1205, %v1213
  %v1216 = vtanh.pop %v1215
  %1218 = vrot.lane.b32.xlu0 %v1216, 32
  %v1219 = vpop.permute.xlu0 %1218
  %v1221 = vmul.f32 %v1203, %v1219
  %1223 = vrot.lane.b32.xlu0 %v1197, 64
  %v1224 = vpop.permute.xlu0 %1223
  %1227 = vrot.lane.b32.xlu0 %v1221, 96
  %v1228 = vpop.permute.xlu0 %1227
  %v1230 = vsel %vm399, %v1224, %v1228
  %v1232 = vsel %vm401, %v1230, 0
  %1234 = vmatprep.subr.mxu0 0.0
  %1235 = vmatpush1.msra.mxu0 0.0
  %1236 = vmatprep.subr.mxu0 0.0
  %1237 = vmatpush1.msra.mxu0 0.0
  %1238 = vmatprep.subr.mxu0 0.0
  %1239 = vmatpush1.msra.mxu0 0.0
  %1240 = vmatprep.subr.mxu0 0.0
  %1241 = vmatpush1.msra.mxu0 0.0
  %1242 = vmatprep.subr.mxu0 0.0
  %1243 = vmatpush1.msra.mxu0 0.0
  %1244 = vmatprep.subr.mxu0 0.0
  %1245 = vmatpush1.msra.mxu0 0.0
  %1246 = vmatprep.subr.mxu0 0.0
  %1247 = vmatpush1.msra.mxu0 0.0
  %1248 = vmatprep.subr.mxu0 0.0
  %1249 = vmatpush1.msra.mxu0 0.0
  %1250 = vmatprep.subr.mxu0 %v390
  %1251 = vmatpush1.msra.mxu0 %v389
  %1252 = vmatprep.subr.mxu0 %v388
  %1253 = vmatpush1.msra.mxu0 %v387
  %1254 = vmatprep.subr.mxu0 %v386
  %1255 = vmatpush1.msra.mxu0 %v385
  %1256 = vmatprep.subr.mxu0 %v384
  %1257 = vmatpush1.msra.mxu0 %v383
  %1258 = vmatprep.subr.mxu0 %v382
  %1259 = vmatpush1.msra.mxu0 %v381
  %1260 = vmatprep.subr.mxu0 %v380
  %1261 = vmatpush1.msra.mxu0 %v379
  %1262 = vmatprep.subr.mxu0 %v378
  %1263 = vmatpush1.msra.mxu0 %v377
  %1264 = vmatprep.subr.mxu0 %v376
  %1265 = vmatpush1.msra.mxu0 %v375
  %1266 = vmatprep.subr.mxu0 0.0
  %1267 = vmatpush2.msra.mxu0 0.0
  %1268 = vmatprep.subr.mxu0 0.0
  %1269 = vmatpush2.msra.mxu0 0.0
  %1270 = vmatprep.subr.mxu0 0.0
  %1271 = vmatpush2.msra.mxu0 0.0
  %1272 = vmatprep.subr.mxu0 0.0
  %1273 = vmatpush2.msra.mxu0 0.0
  %1274 = vmatprep.subr.mxu0 0.0
  %1275 = vmatpush2.msra.mxu0 0.0
  %1276 = vmatprep.subr.mxu0 0.0
  %1277 = vmatpush2.msra.mxu0 0.0
  %1278 = vmatprep.subr.mxu0 0.0
  %1279 = vmatpush2.msra.mxu0 0.0
  %1280 = vmatprep.subr.mxu0 0.0
  %1281 = vmatpush2.msra.mxu0 0.0
  %1282 = vmatprep.subr.mxu0 0.0
  %1283 = vmatpush2.msra.mxu0 0.0
  %1284 = vmatprep.subr.mxu0 0.0
  %1285 = vmatpush2.msra.mxu0 0.0
  %1286 = vmatprep.subr.mxu0 0.0
  %1287 = vmatpush2.msra.mxu0 0.0
  %1288 = vmatprep.subr.mxu0 0.0
  %1289 = vmatpush2.msra.mxu0 0.0
  %1290 = vmatprep.subr.mxu0 0.0
  %1291 = vmatpush2.msra.mxu0 0.0
  %1292 = vmatprep.subr.mxu0 0.0
  %1293 = vmatpush2.msra.mxu0 0.0
  %1294 = vmatprep.subr.mxu0 0.0
  %1295 = vmatpush2.msra.mxu0 0.0
  %1296 = vmatprep.subr.mxu0 0.0
  %1297 = vmatpush2.msra.mxu0 0.0
  %1298 = vmatprep.mubr.f32.mxu0 0.0
  %1299 = vmatmul.mubr.f32.gmra.mxu0 %v1232
  %v1300 = vpop.f32.mrf.mxu0
  %v1301 = vadd.f32 0.0, %v1300
  %v1302 = vpop.f32.mrf.mxu0
  %v1303 = vadd.f32 0.0, %v1302
  %1304 = vdwg.mxu0
  %s1305 = scalar_lea.vmem [#allocation2], 48
  %v1306 = vld [vmem:[%s1305] sm:$0xff]
  %v1307 = vadd.f32 %v1306, %v1301
  %s1308 = scalar_lea.vmem [#allocation3], 8
  %v1309 = vld [vmem:[%s1308] sm:$0xff]
  %v1310 = vadd.f32 %v1309, %v1303
  %v1311 = vxor.u32 %v1307, 2147483648
  %v1312 = vmul.f32 %v1311, 1.442695
  %v1313 = vpow.pop %v1312
  %v1314 = vadd.f32 %v1313, 1.0
  %v1315 = vrcp.pop %v1314
  %v1316 = vmul.f32 1.0, %v1315
  %v1317 = vtanh.pop %v1307
  %v1318 = vmul.f32 %v1316, %v1191
  %1320 = vrot.lane.b32.xlu0 %v1317, 32
  %v1321 = vpop.permute.xlu0 %1320
  %v1323 = vmul.f32 %v1316, %v1321
  %1325 = vrot.lane.b32.xlu0 %v1323, 32
  %v1326 = vpop.permute.xlu0 %1325
  %v1328 = vadd.f32 %v1318, %v1326
  %v1329 = vtanh.pop %v1328
  %1331 = vrot.lane.b32.xlu0 %v1329, 32
  %v1332 = vpop.permute.xlu0 %1331
  %v1334 = vmul.f32 %v1316, %v1332
  %v1335 = vxor.u32 %v1310, 2147483648
  %v1336 = vmul.f32 %v1335, 1.442695
  %v1337 = vpow.pop %v1336
  %v1338 = vadd.f32 %v1337, 1.0
  %v1339 = vrcp.pop %v1338
  %v1340 = vmul.f32 1.0, %v1339
  %v1341 = vtanh.pop %v1310
  %v1342 = vmul.f32 %v1340, %v1215
  %1344 = vrot.lane.b32.xlu0 %v1341, 32
  %v1345 = vpop.permute.xlu0 %1344
  %v1347 = vmul.f32 %v1340, %v1345
  %1349 = vrot.lane.b32.xlu0 %v1347, 32
  %v1350 = vpop.permute.xlu0 %1349
  %v1352 = vadd.f32 %v1342, %v1350
  %v1353 = vtanh.pop %v1352
  %1355 = vrot.lane.b32.xlu0 %v1353, 32
  %v1356 = vpop.permute.xlu0 %1355
  %v1358 = vmul.f32 %v1340, %v1356
  %1360 = vrot.lane.b32.xlu0 %v1334, 64
  %v1361 = vpop.permute.xlu0 %1360
  %1364 = vrot.lane.b32.xlu0 %v1358, 96
  %v1365 = vpop.permute.xlu0 %1364
  %v1367 = vsel %vm399, %v1361, %v1365
  %v1369 = vsel %vm401, %v1367, 0
  %1371 = vmatprep.subr.mxu0 0.0
  %1372 = vmatpush1.msra.mxu0 0.0
  %1373 = vmatprep.subr.mxu0 0.0
  %1374 = vmatpush1.msra.mxu0 0.0
  %1375 = vmatprep.subr.mxu0 0.0
  %1376 = vmatpush1.msra.mxu0 0.0
  %1377 = vmatprep.subr.mxu0 0.0
  %1378 = vmatpush1.msra.mxu0 0.0
  %1379 = vmatprep.subr.mxu0 0.0
  %1380 = vmatpush1.msra.mxu0 0.0
  %1381 = vmatprep.subr.mxu0 0.0
  %1382 = vmatpush1.msra.mxu0 0.0
  %1383 = vmatprep.subr.mxu0 0.0
  %1384 = vmatpush1.msra.mxu0 0.0
  %1385 = vmatprep.subr.mxu0 0.0
  %1386 = vmatpush1.msra.mxu0 0.0
  %1387 = vmatprep.subr.mxu0 %v390
  %1388 = vmatpush1.msra.mxu0 %v389
  %1389 = vmatprep.subr.mxu0 %v388
  %1390 = vmatpush1.msra.mxu0 %v387
  %1391 = vmatprep.subr.mxu0 %v386
  %1392 = vmatpush1.msra.mxu0 %v385
  %1393 = vmatprep.subr.mxu0 %v384
  %1394 = vmatpush1.msra.mxu0 %v383
  %1395 = vmatprep.subr.mxu0 %v382
  %1396 = vmatpush1.msra.mxu0 %v381
  %1397 = vmatprep.subr.mxu0 %v380
  %1398 = vmatpush1.msra.mxu0 %v379
  %1399 = vmatprep.subr.mxu0 %v378
  %1400 = vmatpush1.msra.mxu0 %v377
  %1401 = vmatprep.subr.mxu0 %v376
  %1402 = vmatpush1.msra.mxu0 %v375
  %1403 = vmatprep.subr.mxu0 0.0
  %1404 = vmatpush2.msra.mxu0 0.0
  %1405 = vmatprep.subr.mxu0 0.0
  %1406 = vmatpush2.msra.mxu0 0.0
  %1407 = vmatprep.subr.mxu0 0.0
  %1408 = vmatpush2.msra.mxu0 0.0
  %1409 = vmatprep.subr.mxu0 0.0
  %1410 = vmatpush2.msra.mxu0 0.0
  %1411 = vmatprep.subr.mxu0 0.0
  %1412 = vmatpush2.msra.mxu0 0.0
  %1413 = vmatprep.subr.mxu0 0.0
  %1414 = vmatpush2.msra.mxu0 0.0
  %1415 = vmatprep.subr.mxu0 0.0
  %1416 = vmatpush2.msra.mxu0 0.0
  %1417 = vmatprep.subr.mxu0 0.0
  %1418 = vmatpush2.msra.mxu0 0.0
  %1419 = vmatprep.subr.mxu0 0.0
  %1420 = vmatpush2.msra.mxu0 0.0
  %1421 = vmatprep.subr.mxu0 0.0
  %1422 = vmatpush2.msra.mxu0 0.0
  %1423 = vmatprep.subr.mxu0 0.0
  %1424 = vmatpush2.msra.mxu0 0.0
  %1425 = vmatprep.subr.mxu0 0.0
  %1426 = vmatpush2.msra.mxu0 0.0
  %1427 = vmatprep.subr.mxu0 0.0
  %1428 = vmatpush2.msra.mxu0 0.0
  %1429 = vmatprep.subr.mxu0 0.0
  %1430 = vmatpush2.msra.mxu0 0.0
  %1431 = vmatprep.subr.mxu0 0.0
  %1432 = vmatpush2.msra.mxu0 0.0
  %1433 = vmatprep.subr.mxu0 0.0
  %1434 = vmatpush2.msra.mxu0 0.0
  %1435 = vmatprep.mubr.f32.mxu0 0.0
  %1436 = vmatmul.mubr.f32.gmra.mxu0 %v1369
  %v1437 = vpop.f32.mrf.mxu0
  %v1438 = vadd.f32 0.0, %v1437
  %v1439 = vpop.f32.mrf.mxu0
  %v1440 = vadd.f32 0.0, %v1439
  %1441 = vdwg.mxu0
  %s1442 = scalar_lea.vmem [#allocation2], 56
  %v1443 = vld [vmem:[%s1442] sm:$0xff]
  %v1444 = vadd.f32 %v1443, %v1438
  %v1445 = vld [vmem:[#allocation3] sm:$0xff]
  %v1446 = vadd.f32 %v1445, %v1440
  %v1447 = vxor.u32 %v1444, 2147483648
  %v1448 = vmul.f32 %v1447, 1.442695
  %v1449 = vpow.pop %v1448
  %v1450 = vadd.f32 %v1449, 1.0
  %v1451 = vrcp.pop %v1450
  %v1452 = vmul.f32 1.0, %v1451
  %v1453 = vtanh.pop %v1444
  %v1454 = vmul.f32 %v1452, %v1328
  %1456 = vrot.lane.b32.xlu0 %v1453, 32
  %v1457 = vpop.permute.xlu0 %1456
  %v1459 = vmul.f32 %v1452, %v1457
  %1461 = vrot.lane.b32.xlu0 %v1459, 32
  %v1462 = vpop.permute.xlu0 %1461
  %v1464 = vadd.f32 %v1454, %v1462
  %v1465 = vtanh.pop %v1464
  %1467 = vrot.lane.b32.xlu0 %v1465, 32
  %v1468 = vpop.permute.xlu0 %1467
  %v1470 = vmul.f32 %v1452, %v1468
  %v1471 = vxor.u32 %v1446, 2147483648
  %v1472 = vmul.f32 %v1471, 1.442695
  %v1473 = vpow.pop %v1472
  %v1474 = vadd.f32 %v1473, 1.0
  %v1475 = vrcp.pop %v1474
  %v1476 = vmul.f32 1.0, %v1475
  %v1477 = vtanh.pop %v1446
  %v1478 = vmul.f32 %v1476, %v1352
  %1480 = vrot.lane.b32.xlu0 %v1477, 32
  %v1481 = vpop.permute.xlu0 %1480
  %v1483 = vmul.f32 %v1476, %v1481
  %1485 = vrot.lane.b32.xlu0 %v1483, 32
  %v1486 = vpop.permute.xlu0 %1485
  %v1488 = vadd.f32 %v1478, %v1486
  %v1489 = vtanh.pop %v1488
  %1491 = vrot.lane.b32.xlu0 %v1489, 32
  %v1492 = vpop.permute.xlu0 %1491
  %v1494 = vmul.f32 %v1476, %v1492
  %1496 = vrot.lane.b32.xlu0 %v1470, 64
  %v1497 = vpop.permute.xlu0 %1496
  %1499 = vst.msk [vmem:[#allocation4] sm:$0xff] %vm399, %v1497
  %1501 = vrot.lane.b32.xlu0 %v1464, 96
  %v1502 = vpop.permute.xlu0 %1501
  %1504 = vst.msk [vmem:[#allocation5] sm:$0xff] %vm399, %v1502
  %1506 = vrot.lane.b32.xlu0 %v1494, 64
  %v1507 = vpop.permute.xlu0 %1506
  %1509 = vst.msk [vmem:[#allocation6] sm:$0xff] %vm399, %v1507
  %1511 = vrot.lane.b32.xlu0 %v1488, 96
  %v1512 = vpop.permute.xlu0 %1511
  %1514 = vst.msk [vmem:[#allocation7] sm:$0xff] %vm399, %v1512
  // Predicated region
  $region46: #{bilstm_model_forward.1} parent=0 // pred_check
    %p1515 = pneg %p57
  $region47: #{bilstm_model_forward.1} parent=0 // pred_check_branch
    %1517 = sbr.rel (%p1515) target = $region49
  $region48: #{bilstm_model_forward.1} parent=0 // pred_region
    %v1518 = vld [vmem:[%s7] sm:$0xff]
    %v1519 = vld [vmem:[%s7 + $0x8] sm:$0xff]
    %v1520 = vld [vmem:[%s7 + $0x10] sm:$0xff]
    %v1521 = vld [vmem:[%s7 + $0x18] sm:$0xff]
    %v1522 = vld [vmem:[%s8] sm:$0xff]
    %v1523 = vld [vmem:[%s8 + $0x8] sm:$0xff]
    %v1524 = vld [vmem:[%s8 + $0x10] sm:$0xff]
    %v1525 = vld [vmem:[%s8 + $0x18] sm:$0xff]
    %v1526 = vsel %vm399, %v1507, 0
    %1528 = vmatprep.subr.mxu0 0.0
    %1529 = vmatpush1.msra.mxu0 0.0
    %1530 = vmatprep.subr.mxu0 0.0
    %1531 = vmatpush1.msra.mxu0 0.0
    %1532 = vmatprep.subr.mxu0 0.0
    %1533 = vmatpush1.msra.mxu0 0.0
    %1534 = vmatprep.subr.mxu0 0.0
    %1535 = vmatpush1.msra.mxu0 0.0
    %1536 = vmatprep.subr.mxu0 0.0
    %1537 = vmatpush1.msra.mxu0 0.0
    %1538 = vmatprep.subr.mxu0 0.0
    %1539 = vmatpush1.msra.mxu0 0.0
    %1540 = vmatprep.subr.mxu0 0.0
    %1541 = vmatpush1.msra.mxu0 0.0
    %1542 = vmatprep.subr.mxu0 0.0
    %1543 = vmatpush1.msra.mxu0 0.0
    %1544 = vmatprep.subr.mxu0 0.0
    %1545 = vmatpush1.msra.mxu0 0.0
    %1546 = vmatprep.subr.mxu0 0.0
    %1547 = vmatpush1.msra.mxu0 0.0
    %1548 = vmatprep.subr.mxu0 0.0
    %1549 = vmatpush1.msra.mxu0 0.0
    %1550 = vmatprep.subr.mxu0 0.0
    %1551 = vmatpush1.msra.mxu0 0.0
    %1552 = vmatprep.subr.mxu0 0.0
    %1553 = vmatpush1.msra.mxu0 %v1525
    %1554 = vmatprep.subr.mxu0 0.0
    %1555 = vmatpush1.msra.mxu0 %v1524
    %1556 = vmatprep.subr.mxu0 0.0
    %1557 = vmatpush1.msra.mxu0 %v1523
    %1558 = vmatprep.subr.mxu0 0.0
    %1559 = vmatpush1.msra.mxu0 %v1522
    %1560 = vmatprep.subr.mxu0 0.0
    %1561 = vmatpush2.msra.mxu0 0.0
    %1562 = vmatprep.subr.mxu0 0.0
    %1563 = vmatpush2.msra.mxu0 0.0
    %1564 = vmatprep.subr.mxu0 0.0
    %1565 = vmatpush2.msra.mxu0 0.0
    %1566 = vmatprep.subr.mxu0 0.0
    %1567 = vmatpush2.msra.mxu0 0.0
    %1568 = vmatprep.subr.mxu0 0.0
    %1569 = vmatpush2.msra.mxu0 0.0
    %1570 = vmatprep.subr.mxu0 0.0
    %1571 = vmatpush2.msra.mxu0 0.0
    %1572 = vmatprep.subr.mxu0 0.0
    %1573 = vmatpush2.msra.mxu0 0.0
    %1574 = vmatprep.subr.mxu0 0.0
    %1575 = vmatpush2.msra.mxu0 0.0
    %1576 = vmatprep.subr.mxu0 0.0
    %1577 = vmatpush2.msra.mxu0 0.0
    %1578 = vmatprep.subr.mxu0 0.0
    %1579 = vmatpush2.msra.mxu0 0.0
    %1580 = vmatprep.subr.mxu0 0.0
    %1581 = vmatpush2.msra.mxu0 0.0
    %1582 = vmatprep.subr.mxu0 0.0
    %1583 = vmatpush2.msra.mxu0 0.0
    %1584 = vmatprep.subr.mxu0 0.0
    %1585 = vmatpush2.msra.mxu0 0.0
    %1586 = vmatprep.subr.mxu0 0.0
    %1587 = vmatpush2.msra.mxu0 0.0
    %1588 = vmatprep.subr.mxu0 0.0
    %1589 = vmatpush2.msra.mxu0 0.0
    %1590 = vmatprep.subr.mxu0 0.0
    %1591 = vmatpush2.msra.mxu0 0.0
    %1592 = vmatprep.mubr.f32.mxu0 0.0
    %1593 = vmatmul.mubr.f32.gmra.mxu0 %v1526
    %v1594 = vpop.f32.mrf.mxu0
    %v1595 = vadd.f32 0.0, %v1594
    %v1596 = vpop.f32.mrf.mxu0
    %1597 = vdwg.mxu0
    %v1598 = vsel %vm399, %v1497, 0
    %1600 = vmatprep.subr.mxu0 0.0
    %1601 = vmatpush1.msra.mxu0 0.0
    %1602 = vmatprep.subr.mxu0 0.0
    %1603 = vmatpush1.msra.mxu0 0.0
    %1604 = vmatprep.subr.mxu0 0.0
    %1605 = vmatpush1.msra.mxu0 0.0
    %1606 = vmatprep.subr.mxu0 0.0
    %1607 = vmatpush1.msra.mxu0 0.0
    %1608 = vmatprep.subr.mxu0 0.0
    %1609 = vmatpush1.msra.mxu0 0.0
    %1610 = vmatprep.subr.mxu0 0.0
    %1611 = vmatpush1.msra.mxu0 0.0
    %1612 = vmatprep.subr.mxu0 0.0
    %1613 = vmatpush1.msra.mxu0 0.0
    %1614 = vmatprep.subr.mxu0 0.0
    %1615 = vmatpush1.msra.mxu0 0.0
    %1616 = vmatprep.subr.mxu0 0.0
    %1617 = vmatpush1.msra.mxu0 0.0
    %1618 = vmatprep.subr.mxu0 0.0
    %1619 = vmatpush1.msra.mxu0 0.0
    %1620 = vmatprep.subr.mxu0 0.0
    %1621 = vmatpush1.msra.mxu0 0.0
    %1622 = vmatprep.subr.mxu0 0.0
    %1623 = vmatpush1.msra.mxu0 0.0
    %1624 = vmatprep.subr.mxu0 0.0
    %1625 = vmatpush1.msra.mxu0 %v1521
    %1626 = vmatprep.subr.mxu0 0.0
    %1627 = vmatpush1.msra.mxu0 %v1520
    %1628 = vmatprep.subr.mxu0 0.0
    %1629 = vmatpush1.msra.mxu0 %v1519
    %1630 = vmatprep.subr.mxu0 0.0
    %1631 = vmatpush1.msra.mxu0 %v1518
    %1632 = vmatprep.subr.mxu0 0.0
    %1633 = vmatpush2.msra.mxu0 0.0
    %1634 = vmatprep.subr.mxu0 0.0
    %1635 = vmatpush2.msra.mxu0 0.0
    %1636 = vmatprep.subr.mxu0 0.0
    %1637 = vmatpush2.msra.mxu0 0.0
    %1638 = vmatprep.subr.mxu0 0.0
    %1639 = vmatpush2.msra.mxu0 0.0
    %1640 = vmatprep.subr.mxu0 0.0
    %1641 = vmatpush2.msra.mxu0 0.0
    %1642 = vmatprep.subr.mxu0 0.0
    %1643 = vmatpush2.msra.mxu0 0.0
    %1644 = vmatprep.subr.mxu0 0.0
    %1645 = vmatpush2.msra.mxu0 0.0
    %1646 = vmatprep.subr.mxu0 0.0
    %1647 = vmatpush2.msra.mxu0 0.0
    %1648 = vmatprep.subr.mxu0 0.0
    %1649 = vmatpush2.msra.mxu0 0.0
    %1650 = vmatprep.subr.mxu0 0.0
    %1651 = vmatpush2.msra.mxu0 0.0
    %1652 = vmatprep.subr.mxu0 0.0
    %1653 = vmatpush2.msra.mxu0 0.0
    %1654 = vmatprep.subr.mxu0 0.0
    %1655 = vmatpush2.msra.mxu0 0.0
    %1656 = vmatprep.subr.mxu0 0.0
    %1657 = vmatpush2.msra.mxu0 0.0
    %1658 = vmatprep.subr.mxu0 0.0
    %1659 = vmatpush2.msra.mxu0 0.0
    %1660 = vmatprep.subr.mxu0 0.0
    %1661 = vmatpush2.msra.mxu0 0.0
    %1662 = vmatprep.subr.mxu0 0.0
    %1663 = vmatpush2.msra.mxu0 0.0
    %1664 = vmatprep.mubr.f32.mxu0 0.0
    %1665 = vmatmul.mubr.f32.gmra.mxu0 %v1598
    %v1666 = vpop.f32.mrf.mxu0
    %v1667 = vadd.f32 %v1595, %v1666
    %v1668 = vpop.f32.mrf.mxu0
    %1669 = vdwg.mxu0
    %v1670 = vld [vmem:[%s9] sm:$0x1]
    %v1672 = vlaneseq
    %v1673 = vshrl.u32 %v1672, 7
    %v1674 = vsub.s32 0, %v1673
    %v1675 = vrot.slane %v1670, %v1674
    %v1677 = vadd.f32 %v1667, %v1675
    %vm1678 = vcmask 31744
    %1679 = vst.msk [vmem:[%s10] sm:$0xff] %vm1678, %v1677
  $region49: #{bilstm_model_forward.1} parent=0 // pred_fallthru
    _
  // Predicated region
  $region50: #{bilstm_model_forward.1} parent=0 // pred_check
    _
  $region51: #{bilstm_model_forward.1} parent=0 // pred_check_branch
    %1681 = sbr.rel (0) target = $region53
  $region52: #{bilstm_model_forward.1} parent=0 // pred_region
    _
  $region53: #{bilstm_model_forward.1} parent=0 // pred_fallthru
    _
  // Predicated region
  $region54: #{bilstm_model_forward.1} parent=0 // pred_check
    _
  $region55: #{bilstm_model_forward.1} parent=0 // pred_check_branch
    %1683 = sbr.rel (0) target = $region57
  $region56: #{bilstm_model_forward.1} parent=0 // pred_region
    _
  $region57: #{bilstm_model_forward.1} parent=0 // pred_fallthru
    _

</llo_original>
